<compile_context>
chip_gen: v7x
topology: tpu7x:2x2x1
jax: 0.10.0
libtpu: 0.0.40
codegen_flags: <defaults>
</compile_context>

<pallas_src>
import functools
import math

import jax
import jax.numpy as jnp
from jax.experimental import pallas as pl
from jax.experimental.pallas import tpu as pltpu


def _round_up(x, m):
    return ((x + m - 1) // m) * m


# --------------------------- fused LSTM (+FC) kernel ---------------------------

def _fused_lstm_kernel(*refs, num_layers, seq_len, batch_pad, hidden):
    """Single-invocation fused kernel: all LSTM layers + final FC.

    refs layout (inputs, outputs, scratch):
      [0]                x      (T*Bp, Dp)   time-major, batch/feature padded, bf16
      [1+3l .. 3+3l]     layer l: W_ih^T (Din, 4H) bf16, W_hh^T (H, 4H) bf16,
                                  bias (1, 4H) f32   (bias = b_ih + b_hh)
      [1+3L], [2+3L]     W_fc^T (H, Op) bf16, b_fc (1, Op) f32
      [3+3L]             out    (Bp, Op) f32
      [4+3L]             scratch: xproj (T*Bp, 4H) f32 (layer-0 input projection)
    """
    L, T, Bp, H = num_layers, seq_len, batch_pad, hidden
    f32, bf16 = jnp.float32, jnp.bfloat16

    x_ref = refs[0]
    layer_refs = [(refs[1 + 3 * l], refs[2 + 3 * l], refs[3 + 3 * l]) for l in range(L)]
    wfc_ref = refs[1 + 3 * L]
    bfc_ref = refs[2 + 3 * L]
    out_ref = refs[3 + 3 * L]
    xp_ref = refs[4 + 3 * L]

    # cuDNN-style hoist: layer-0 input projection for ALL timesteps in one MXU
    # matmul, bias folded in; only h @ W_hh stays on the serial path.
    wih0_ref, _, b0_ref = layer_refs[0]
    xp_ref[...] = (jnp.dot(x_ref[...], wih0_ref[...], preferred_element_type=f32)
                   + b0_ref[...])

    # Tiny per-step weights kept resident as values ((H, 4H) = (32, 128) bf16).
    whh = [layer_refs[l][1][...] for l in range(L)]
    wih = [None] + [layer_refs[l][0][...] for l in range(1, L)]
    bias = [None] + [layer_refs[l][2][...] for l in range(1, L)]

    # PyTorch semantics: h0 = c0 = 0.
    h = [jnp.zeros((Bp, H), f32) for _ in range(L)]
    c = [jnp.zeros((Bp, H), f32) for _ in range(L)]

    # Wavefront interleave: at wavefront step w, layer l handles t = w - l.
    # Layers are visited in REVERSE order inside a wavefront step so layer l
    # reads h[l-1] (written on the previous wavefront step) before layer l-1
    # overwrites it -> all bodies in a step are mutually independent and the
    # LLO scheduler can overlap adjacent layers' latency-bound recurrences.
    # T = 8 here, so the loop is fully static/unrolled (TODO(synk): cap unroll
    # for large T).
    for w in range(T + L - 1):
        for l in reversed(range(L)):
            t = w - l
            if not (0 <= t < T):
                continue
            if l == 0:
                gates = (xp_ref[pl.ds(t * Bp, Bp), :]
                         + jnp.dot(h[0].astype(bf16), whh[0],
                                   preferred_element_type=f32))
            else:
                # Input projection folded into the per-step path (no barrier on
                # the full lower-layer sequence) -> enables the wavefront.
                gates = (jnp.dot(h[l - 1].astype(bf16), wih[l],
                                 preferred_element_type=f32)
                         + jnp.dot(h[l].astype(bf16), whh[l],
                                   preferred_element_type=f32)
                         + bias[l])
            # Packed gates: 4*H == 128 lanes -> one sigmoid pass over the whole
            # packed vreg (i|f|.|o), one narrow tanh for g, one tanh for c.
            # All gate math in f32 (safe on v5e too).
            sig = jax.nn.sigmoid(gates)
            i_g = sig[:, 0 * H:1 * H]
            f_g = sig[:, 1 * H:2 * H]
            o_g = sig[:, 3 * H:4 * H]
            g_g = jnp.tanh(gates[:, 2 * H:3 * H])
            c[l] = f_g * c[l] + i_g * g_g
            h[l] = o_g * jnp.tanh(c[l])

    # Final FC fused onto the top layer's last hidden state; lane-dense store.
    out_ref[...] = (jnp.dot(h[L - 1].astype(bf16), wfc_ref[...],
                            preferred_element_type=f32)
                    + bfc_ref[...])


# ------------------------------- Model wrapper ---------------------------------

class LSTMModelPallas:
    def __init__(self, input_size, hidden_size, num_layers, dropout,
                 output_size=1, key=jax.random.PRNGKey(0)):
        self.input_size = input_size
        self.hidden_size = hidden_size
        self.num_layers = num_layers
        self.dropout = dropout  # TODO(synk): inter-layer dropout is a no-op (eval-mode semantics).
        self.output_size = output_size

        # --- raw parameters (PyTorch layout, used by the pure-JAX reference) ---
        H = hidden_size
        k = 1.0 / math.sqrt(H)
        keys = jax.random.split(key, num_layers * 4 + 2)
        self.params = []
        for l in range(num_layers):
            d_in = input_size if l == 0 else H
            kw = keys[4 * l: 4 * l + 4]
            w_ih = jax.random.uniform(kw[0], (4 * H, d_in), jnp.float32, -k, k)
            w_hh = jax.random.uniform(kw[1], (4 * H, H), jnp.float32, -k, k)
            b_ih = jax.random.uniform(kw[2], (4 * H,), jnp.float32, -k, k)
            b_hh = jax.random.uniform(kw[3], (4 * H,), jnp.float32, -k, k)
            self.params.append((w_ih, w_hh, b_ih, b_hh))
        self.w_fc = jax.random.uniform(keys[-2], (output_size, H), jnp.float32, -k, k)
        self.b_fc = jax.random.uniform(keys[-1], (output_size,), jnp.float32, -k, k)

        # --- pre-transposed / padded / bf16-cast weights (hoisted out of forward) ---
        self.Dp = _round_up(input_size, 16)          # pad feature dim (zero rows/cols)
        self.Op = _round_up(output_size, 128)        # lane-dense output store
        self.prepped = []
        for l, (w_ih, w_hh, b_ih, b_hh) in enumerate(self.params):
            if l == 0:
                wih_t = jnp.zeros((self.Dp, 4 * H), jnp.float32)
                wih_t = wih_t.at[:input_size, :].set(jnp.transpose(w_ih))
            else:
                wih_t = jnp.transpose(w_ih)          # (H, 4H)
            whh_t = jnp.transpose(w_hh)              # (H, 4H)
            b = (b_ih + b_hh).astype(jnp.float32).reshape(1, 4 * H)
            self.prepped.append((wih_t.astype(jnp.bfloat16),
                                 whh_t.astype(jnp.bfloat16), b))
        wfc_t = jnp.zeros((H, self.Op), jnp.float32).at[:, :output_size].set(
            jnp.transpose(self.w_fc))
        self.wfc_p = wfc_t.astype(jnp.bfloat16)
        self.bfc_p = jnp.zeros((1, self.Op), jnp.float32).at[0, :output_size].set(
            self.b_fc.astype(jnp.float32))

        self._forward = jax.jit(self._forward_impl)

    def _forward_impl(self, x):
        # x: (B, T, input_size), batch_first like nn.LSTM(batch_first=True).
        B, T, D = x.shape
        H = self.hidden_size
        Bp = _round_up(B, 8)
        Dp, Op = self.Dp, self.Op

        x = x.astype(jnp.float32)
        x = jnp.pad(x, ((0, Bp - B), (0, 0), (0, Dp - D)))   # padded rows/cols = 0
        # TODO(synk): this tiny (B,T,D)->(T*Bp,Dp) relayout runs as a fused XLA
        # copy before the kernel; it could be folded in via per-step BlockSpecs.
        x_tm = jnp.transpose(x, (1, 0, 2)).reshape(T * Bp, Dp).astype(jnp.bfloat16)

        flat_w = []
        for (wih_p, whh_p, b_p) in self.prepped:
            flat_w += [wih_p, whh_p, b_p]
        flat_w += [self.wfc_p, self.bfc_p]

        kernel = functools.partial(
            _fused_lstm_kernel, num_layers=self.num_layers, seq_len=T,
            batch_pad=Bp, hidden=H)

        # All operands are small: full-array blocks (satisfies the (8,128) rule
        # because block == full array shape).
        in_specs = [pl.BlockSpec(a.shape, lambda i: (0, 0)) for a in [x_tm] + flat_w]

        out = pl.pallas_call(
            kernel,
            out_shape=jax.ShapeDtypeStruct((Bp, Op), jnp.float32),
            grid_spec=pltpu.PrefetchScalarGridSpec(
                num_scalar_prefetch=0,
                grid=(1,),                               # whole forward in one step
                in_specs=in_specs,
                out_specs=pl.BlockSpec((Bp, Op), lambda i: (0, 0)),
                scratch_shapes=[
                    pltpu.VMEM((T * Bp, 4 * H), jnp.float32),  # layer-0 x-projection
                ],
            ),
            compiler_params=pltpu.CompilerParams(
                dimension_semantics=("arbitrary",)),
        )(x_tm, *flat_w)

        return out[:B, :self.output_size]

    def __call__(self, x):
        return self._forward(x)


# ------------------------------ pure-JAX reference ------------------------------

def _reference_forward(model, x):
    x = jnp.transpose(x.astype(jnp.float32), (1, 0, 2))  # (T, B, D)
    for (w_ih, w_hh, b_ih, b_hh) in model.params:
        H = model.hidden_size
        B = x.shape[1]

        def step(carry, x_t):
            h, c = carry
            gates = x_t @ w_ih.T + h @ w_hh.T + b_ih + b_hh
            i = jax.nn.sigmoid(gates[:, :H])
            f = jax.nn.sigmoid(gates[:, H:2 * H])
            g = jnp.tanh(gates[:, 2 * H:3 * H])
            o = jax.nn.sigmoid(gates[:, 3 * H:])
            c = f * c + i * g
            h = o * jnp.tanh(c)
            return (h, c), h

        init = (jnp.zeros((B, H), jnp.float32), jnp.zeros((B, H), jnp.float32))
        _, x = jax.lax.scan(step, init, x)
    return x[-1] @ model.w_fc.T + model.b_fc


# ------------------------------------ main --------------------------------------

if __name__ == "__main__":
    B, T, D = 2, 8, 4
    hidden, layers = 32, 2

    key = jax.random.PRNGKey(0)
    kx, kp = jax.random.split(key)
    x = jax.random.normal(kx, (B, T, D), dtype=jnp.float32)

    model = LSTMModelPallas(input_size=D, hidden_size=hidden, num_layers=layers,
                            dropout=0.0, output_size=1, key=kp)

    out = jax.block_until_ready(model(x))
    assert out.shape == (B, 1), out.shape

    ref = jax.block_until_ready(_reference_forward(model, x))
    # bf16 matmul operands (f32 accumulation + f32 gate math) -> loosened tolerance
    # vs. the pure-f32 reference, per the perf review.
    assert jnp.allclose(out, ref, atol=5e-2, rtol=5e-2), (out, ref)

    print("KERNEL_OK")
</pallas_src>

<mosaic_0001>
module attributes {stable_mosaic.version = 11 : i64} {
  func.func @_fused_lstm_kernel(%arg0: i32, %arg1: memref<64x16xbf16, #tpu.memory_space<vmem>>, %arg2: memref<16x128xbf16, #tpu.memory_space<vmem>>, %arg3: memref<32x128xbf16, #tpu.memory_space<vmem>>, %arg4: memref<1x128xf32, #tpu.memory_space<vmem>>, %arg5: memref<32x128xbf16, #tpu.memory_space<vmem>>, %arg6: memref<32x128xbf16, #tpu.memory_space<vmem>>, %arg7: memref<1x128xf32, #tpu.memory_space<vmem>>, %arg8: memref<32x128xbf16, #tpu.memory_space<vmem>>, %arg9: memref<1x128xf32, #tpu.memory_space<vmem>>, %arg10: memref<8x128xf32, #tpu.memory_space<vmem>>, %arg11: memref<64x128xf32, #tpu.memory_space<vmem>>) attributes {dimension_semantics = [#tpu.dimension_semantics<arbitrary>], iteration_bounds = array<i64: 1>, scalar_prefetch = 0 : i64, scratch_operands = 1 : i64, tpu.core_type = #tpu.core_type<tc>, window_params = [{pipeline_mode = #tpu.pipeline_mode<synchronous>, transform_indices = @transform_0, window_bounds = array<i64: 64, 16>}, {pipeline_mode = #tpu.pipeline_mode<synchronous>, transform_indices = @transform_1, window_bounds = array<i64: 16, 128>}, {pipeline_mode = #tpu.pipeline_mode<synchronous>, transform_indices = @transform_2, window_bounds = array<i64: 32, 128>}, {pipeline_mode = #tpu.pipeline_mode<synchronous>, transform_indices = @transform_3, window_bounds = array<i64: 1, 128>}, {pipeline_mode = #tpu.pipeline_mode<synchronous>, transform_indices = @transform_4, window_bounds = array<i64: 32, 128>}, {pipeline_mode = #tpu.pipeline_mode<synchronous>, transform_indices = @transform_5, window_bounds = array<i64: 32, 128>}, {pipeline_mode = #tpu.pipeline_mode<synchronous>, transform_indices = @transform_6, window_bounds = array<i64: 1, 128>}, {pipeline_mode = #tpu.pipeline_mode<synchronous>, transform_indices = @transform_7, window_bounds = array<i64: 32, 128>}, {pipeline_mode = #tpu.pipeline_mode<synchronous>, transform_indices = @transform_8, window_bounds = array<i64: 1, 128>}, {pipeline_mode = #tpu.pipeline_mode<synchronous>, transform_indices = @transform_9, window_bounds = array<i64: 8, 128>}]} {
    %c0 = arith.constant 0 : index
    %c0_0 = arith.constant 0 : index
    %0 = vector.load %arg1[%c0, %c0_0] : memref<64x16xbf16, #tpu.memory_space<vmem>>, vector<64x16xbf16>
    %c0_1 = arith.constant 0 : index
    %c0_2 = arith.constant 0 : index
    %1 = vector.load %arg2[%c0_1, %c0_2] : memref<16x128xbf16, #tpu.memory_space<vmem>>, vector<16x128xbf16>
    %cst = arith.constant dense<0.000000e+00> : vector<64x128xf32>
    %2 = tpu.matmul %0, %1, %cst {dimension_numbers = #tpu.dot_dimension_numbers<[1], [0], [0], [1], [0, 0, 1, 1], [], []>} : vector<64x16xbf16>, vector<16x128xbf16>, vector<64x128xf32> -> vector<64x128xf32>
    %c0_3 = arith.constant 0 : index
    %c0_4 = arith.constant 0 : index
    %3 = vector.load %arg4[%c0_3, %c0_4] : memref<1x128xf32, #tpu.memory_space<vmem>>, vector<1x128xf32>
    %4 = vector.broadcast %3 : vector<1x128xf32> to vector<64x128xf32>
    %5 = arith.addf %2, %4 : vector<64x128xf32>
    %c0_5 = arith.constant 0 : index
    %c0_6 = arith.constant 0 : index
    %6 = vector.load %arg11[%c0_5, %c0_6] : memref<64x128xf32, #tpu.memory_space<vmem>>, vector<64x128xf32>
    tpu.vector_store %arg11[%c0_5, %c0_6], %5 {strides = array<i32>} : memref<64x128xf32, #tpu.memory_space<vmem>>, vector<64x128xf32>,
    %c0_7 = arith.constant 0 : index
    %c0_8 = arith.constant 0 : index
    %7 = vector.load %arg3[%c0_7, %c0_8] : memref<32x128xbf16, #tpu.memory_space<vmem>>, vector<32x128xbf16>
    %c0_9 = arith.constant 0 : index
    %c0_10 = arith.constant 0 : index
    %8 = vector.load %arg6[%c0_9, %c0_10] : memref<32x128xbf16, #tpu.memory_space<vmem>>, vector<32x128xbf16>
    %c0_11 = arith.constant 0 : index
    %c0_12 = arith.constant 0 : index
    %9 = vector.load %arg5[%c0_11, %c0_12] : memref<32x128xbf16, #tpu.memory_space<vmem>>, vector<32x128xbf16>
    %c0_13 = arith.constant 0 : index
    %c0_14 = arith.constant 0 : index
    %10 = vector.load %arg7[%c0_13, %c0_14] : memref<1x128xf32, #tpu.memory_space<vmem>>, vector<1x128xf32>
    %cst_15 = arith.constant 0.000000e+00 : f32
    %11 = vector.broadcast %cst_15 : f32 to vector<8x32xf32>
    %cst_16 = arith.constant 0.000000e+00 : f32
    %12 = vector.broadcast %cst_16 : f32 to vector<8x32xf32>
    %cst_17 = arith.constant 0.000000e+00 : f32
    %13 = vector.broadcast %cst_17 : f32 to vector<8x32xf32>
    %cst_18 = arith.constant 0.000000e+00 : f32
    %14 = vector.broadcast %cst_18 : f32 to vector<8x32xf32>
    %c0_19 = arith.constant 0 : index
    %c0_20 = arith.constant 0 : index
    %15 = vector.load %arg11[%c0_19, %c0_20] : memref<64x128xf32, #tpu.memory_space<vmem>>, vector<8x128xf32>
    %16 = arith.truncf %11 : vector<8x32xf32> to vector<8x32xbf16>
    %cst_21 = arith.constant dense<0.000000e+00> : vector<8x128xf32>
    %17 = tpu.matmul %16, %7, %cst_21 {dimension_numbers = #tpu.dot_dimension_numbers<[1], [0], [0], [1], [0, 0, 1, 1], [], []>} : vector<8x32xbf16>, vector<32x128xbf16>, vector<8x128xf32> -> vector<8x128xf32>
    %18 = arith.addf %15, %17 : vector<8x128xf32>
    %19 = arith.negf %18 : vector<8x128xf32>
    %20 = math.exp %19 : vector<8x128xf32>
    %cst_22 = arith.constant 1.000000e+00 : f32
    %21 = vector.broadcast %cst_22 : f32 to vector<8x128xf32>
    %22 = arith.addf %21, %20 : vector<8x128xf32>
    %23 = arith.divf %21, %22 : vector<8x128xf32>
    %24 = vector.extract_strided_slice %23 {offsets = [0, 0], sizes = [8, 32], strides = [1, 1]} : vector<8x128xf32> to vector<8x32xf32>
    %25 = vector.extract_strided_slice %23 {offsets = [0, 32], sizes = [8, 32], strides = [1, 1]} : vector<8x128xf32> to vector<8x32xf32>
    %26 = vector.extract_strided_slice %23 {offsets = [0, 96], sizes = [8, 32], strides = [1, 1]} : vector<8x128xf32> to vector<8x32xf32>
    %27 = vector.extract_strided_slice %18 {offsets = [0, 64], sizes = [8, 32], strides = [1, 1]} : vector<8x128xf32> to vector<8x32xf32>
    %28 = math.tanh %27 : vector<8x32xf32>
    %29 = arith.mulf %25, %13 : vector<8x32xf32>
    %30 = arith.mulf %24, %28 : vector<8x32xf32>
    %31 = arith.addf %29, %30 : vector<8x32xf32>
    %32 = math.tanh %31 : vector<8x32xf32>
    %33 = arith.mulf %26, %32 : vector<8x32xf32>
    %34 = arith.truncf %33 : vector<8x32xf32> to vector<8x32xbf16>
    %cst_23 = arith.constant dense<0.000000e+00> : vector<8x128xf32>
    %35 = tpu.matmul %34, %9, %cst_23 {dimension_numbers = #tpu.dot_dimension_numbers<[1], [0], [0], [1], [0, 0, 1, 1], [], []>} : vector<8x32xbf16>, vector<32x128xbf16>, vector<8x128xf32> -> vector<8x128xf32>
    %36 = arith.truncf %12 : vector<8x32xf32> to vector<8x32xbf16>
    %cst_24 = arith.constant dense<0.000000e+00> : vector<8x128xf32>
    %37 = tpu.matmul %36, %8, %cst_24 {dimension_numbers = #tpu.dot_dimension_numbers<[1], [0], [0], [1], [0, 0, 1, 1], [], []>} : vector<8x32xbf16>, vector<32x128xbf16>, vector<8x128xf32> -> vector<8x128xf32>
    %38 = arith.addf %35, %37 : vector<8x128xf32>
    %39 = vector.broadcast %10 : vector<1x128xf32> to vector<8x128xf32>
    %40 = arith.addf %38, %39 : vector<8x128xf32>
    %41 = arith.negf %40 : vector<8x128xf32>
    %42 = math.exp %41 : vector<8x128xf32>
    %cst_25 = arith.constant 1.000000e+00 : f32
    %43 = vector.broadcast %cst_25 : f32 to vector<8x128xf32>
    %44 = arith.addf %43, %42 : vector<8x128xf32>
    %45 = arith.divf %43, %44 : vector<8x128xf32>
    %46 = vector.extract_strided_slice %45 {offsets = [0, 0], sizes = [8, 32], strides = [1, 1]} : vector<8x128xf32> to vector<8x32xf32>
    %47 = vector.extract_strided_slice %45 {offsets = [0, 32], sizes = [8, 32], strides = [1, 1]} : vector<8x128xf32> to vector<8x32xf32>
    %48 = vector.extract_strided_slice %45 {offsets = [0, 96], sizes = [8, 32], strides = [1, 1]} : vector<8x128xf32> to vector<8x32xf32>
    %49 = vector.extract_strided_slice %40 {offsets = [0, 64], sizes = [8, 32], strides = [1, 1]} : vector<8x128xf32> to vector<8x32xf32>
    %50 = math.tanh %49 : vector<8x32xf32>
    %51 = arith.mulf %47, %14 : vector<8x32xf32>
    %52 = arith.mulf %46, %50 : vector<8x32xf32>
    %53 = arith.addf %51, %52 : vector<8x32xf32>
    %54 = math.tanh %53 : vector<8x32xf32>
    %55 = arith.mulf %48, %54 : vector<8x32xf32>
    %c8 = arith.constant 8 : index
    %c0_26 = arith.constant 0 : index
    %56 = vector.load %arg11[%c8, %c0_26] : memref<64x128xf32, #tpu.memory_space<vmem>>, vector<8x128xf32>
    %57 = arith.truncf %33 : vector<8x32xf32> to vector<8x32xbf16>
    %cst_27 = arith.constant dense<0.000000e+00> : vector<8x128xf32>
    %58 = tpu.matmul %57, %7, %cst_27 {dimension_numbers = #tpu.dot_dimension_numbers<[1], [0], [0], [1], [0, 0, 1, 1], [], []>} : vector<8x32xbf16>, vector<32x128xbf16>, vector<8x128xf32> -> vector<8x128xf32>
    %59 = arith.addf %56, %58 : vector<8x128xf32>
    %60 = arith.negf %59 : vector<8x128xf32>
    %61 = math.exp %60 : vector<8x128xf32>
    %cst_28 = arith.constant 1.000000e+00 : f32
    %62 = vector.broadcast %cst_28 : f32 to vector<8x128xf32>
    %63 = arith.addf %62, %61 : vector<8x128xf32>
    %64 = arith.divf %62, %63 : vector<8x128xf32>
    %65 = vector.extract_strided_slice %64 {offsets = [0, 0], sizes = [8, 32], strides = [1, 1]} : vector<8x128xf32> to vector<8x32xf32>
    %66 = vector.extract_strided_slice %64 {offsets = [0, 32], sizes = [8, 32], strides = [1, 1]} : vector<8x128xf32> to vector<8x32xf32>
    %67 = vector.extract_strided_slice %64 {offsets = [0, 96], sizes = [8, 32], strides = [1, 1]} : vector<8x128xf32> to vector<8x32xf32>
    %68 = vector.extract_strided_slice %59 {offsets = [0, 64], sizes = [8, 32], strides = [1, 1]} : vector<8x128xf32> to vector<8x32xf32>
    %69 = math.tanh %68 : vector<8x32xf32>
    %70 = arith.mulf %66, %31 : vector<8x32xf32>
    %71 = arith.mulf %65, %69 : vector<8x32xf32>
    %72 = arith.addf %70, %71 : vector<8x32xf32>
    %73 = math.tanh %72 : vector<8x32xf32>
    %74 = arith.mulf %67, %73 : vector<8x32xf32>
    %75 = arith.truncf %74 : vector<8x32xf32> to vector<8x32xbf16>
    %cst_29 = arith.constant dense<0.000000e+00> : vector<8x128xf32>
    %76 = tpu.matmul %75, %9, %cst_29 {dimension_numbers = #tpu.dot_dimension_numbers<[1], [0], [0], [1], [0, 0, 1, 1], [], []>} : vector<8x32xbf16>, vector<32x128xbf16>, vector<8x128xf32> -> vector<8x128xf32>
    %77 = arith.truncf %55 : vector<8x32xf32> to vector<8x32xbf16>
    %cst_30 = arith.constant dense<0.000000e+00> : vector<8x128xf32>
    %78 = tpu.matmul %77, %8, %cst_30 {dimension_numbers = #tpu.dot_dimension_numbers<[1], [0], [0], [1], [0, 0, 1, 1], [], []>} : vector<8x32xbf16>, vector<32x128xbf16>, vector<8x128xf32> -> vector<8x128xf32>
    %79 = arith.addf %76, %78 : vector<8x128xf32>
    %80 = vector.broadcast %10 : vector<1x128xf32> to vector<8x128xf32>
    %81 = arith.addf %79, %80 : vector<8x128xf32>
    %82 = arith.negf %81 : vector<8x128xf32>
    %83 = math.exp %82 : vector<8x128xf32>
    %cst_31 = arith.constant 1.000000e+00 : f32
    %84 = vector.broadcast %cst_31 : f32 to vector<8x128xf32>
    %85 = arith.addf %84, %83 : vector<8x128xf32>
    %86 = arith.divf %84, %85 : vector<8x128xf32>
    %87 = vector.extract_strided_slice %86 {offsets = [0, 0], sizes = [8, 32], strides = [1, 1]} : vector<8x128xf32> to vector<8x32xf32>
    %88 = vector.extract_strided_slice %86 {offsets = [0, 32], sizes = [8, 32], strides = [1, 1]} : vector<8x128xf32> to vector<8x32xf32>
    %89 = vector.extract_strided_slice %86 {offsets = [0, 96], sizes = [8, 32], strides = [1, 1]} : vector<8x128xf32> to vector<8x32xf32>
    %90 = vector.extract_strided_slice %81 {offsets = [0, 64], sizes = [8, 32], strides = [1, 1]} : vector<8x128xf32> to vector<8x32xf32>
    %91 = math.tanh %90 : vector<8x32xf32>
    %92 = arith.mulf %88, %53 : vector<8x32xf32>
    %93 = arith.mulf %87, %91 : vector<8x32xf32>
    %94 = arith.addf %92, %93 : vector<8x32xf32>
    %95 = math.tanh %94 : vector<8x32xf32>
    %96 = arith.mulf %89, %95 : vector<8x32xf32>
    %c16 = arith.constant 16 : index
    %c0_32 = arith.constant 0 : index
    %97 = vector.load %arg11[%c16, %c0_32] : memref<64x128xf32, #tpu.memory_space<vmem>>, vector<8x128xf32>
    %98 = arith.truncf %74 : vector<8x32xf32> to vector<8x32xbf16>
    %cst_33 = arith.constant dense<0.000000e+00> : vector<8x128xf32>
    %99 = tpu.matmul %98, %7, %cst_33 {dimension_numbers = #tpu.dot_dimension_numbers<[1], [0], [0], [1], [0, 0, 1, 1], [], []>} : vector<8x32xbf16>, vector<32x128xbf16>, vector<8x128xf32> -> vector<8x128xf32>
    %100 = arith.addf %97, %99 : vector<8x128xf32>
    %101 = arith.negf %100 : vector<8x128xf32>
    %102 = math.exp %101 : vector<8x128xf32>
    %cst_34 = arith.constant 1.000000e+00 : f32
    %103 = vector.broadcast %cst_34 : f32 to vector<8x128xf32>
    %104 = arith.addf %103, %102 : vector<8x128xf32>
    %105 = arith.divf %103, %104 : vector<8x128xf32>
    %106 = vector.extract_strided_slice %105 {offsets = [0, 0], sizes = [8, 32], strides = [1, 1]} : vector<8x128xf32> to vector<8x32xf32>
    %107 = vector.extract_strided_slice %105 {offsets = [0, 32], sizes = [8, 32], strides = [1, 1]} : vector<8x128xf32> to vector<8x32xf32>
    %108 = vector.extract_strided_slice %105 {offsets = [0, 96], sizes = [8, 32], strides = [1, 1]} : vector<8x128xf32> to vector<8x32xf32>
    %109 = vector.extract_strided_slice %100 {offsets = [0, 64], sizes = [8, 32], strides = [1, 1]} : vector<8x128xf32> to vector<8x32xf32>
    %110 = math.tanh %109 : vector<8x32xf32>
    %111 = arith.mulf %107, %72 : vector<8x32xf32>
    %112 = arith.mulf %106, %110 : vector<8x32xf32>
    %113 = arith.addf %111, %112 : vector<8x32xf32>
    %114 = math.tanh %113 : vector<8x32xf32>
    %115 = arith.mulf %108, %114 : vector<8x32xf32>
    %116 = arith.truncf %115 : vector<8x32xf32> to vector<8x32xbf16>
    %cst_35 = arith.constant dense<0.000000e+00> : vector<8x128xf32>
    %117 = tpu.matmul %116, %9, %cst_35 {dimension_numbers = #tpu.dot_dimension_numbers<[1], [0], [0], [1], [0, 0, 1, 1], [], []>} : vector<8x32xbf16>, vector<32x128xbf16>, vector<8x128xf32> -> vector<8x128xf32>
    %118 = arith.truncf %96 : vector<8x32xf32> to vector<8x32xbf16>
    %cst_36 = arith.constant dense<0.000000e+00> : vector<8x128xf32>
    %119 = tpu.matmul %118, %8, %cst_36 {dimension_numbers = #tpu.dot_dimension_numbers<[1], [0], [0], [1], [0, 0, 1, 1], [], []>} : vector<8x32xbf16>, vector<32x128xbf16>, vector<8x128xf32> -> vector<8x128xf32>
    %120 = arith.addf %117, %119 : vector<8x128xf32>
    %121 = vector.broadcast %10 : vector<1x128xf32> to vector<8x128xf32>
    %122 = arith.addf %120, %121 : vector<8x128xf32>
    %123 = arith.negf %122 : vector<8x128xf32>
    %124 = math.exp %123 : vector<8x128xf32>
    %cst_37 = arith.constant 1.000000e+00 : f32
    %125 = vector.broadcast %cst_37 : f32 to vector<8x128xf32>
    %126 = arith.addf %125, %124 : vector<8x128xf32>
    %127 = arith.divf %125, %126 : vector<8x128xf32>
    %128 = vector.extract_strided_slice %127 {offsets = [0, 0], sizes = [8, 32], strides = [1, 1]} : vector<8x128xf32> to vector<8x32xf32>
    %129 = vector.extract_strided_slice %127 {offsets = [0, 32], sizes = [8, 32], strides = [1, 1]} : vector<8x128xf32> to vector<8x32xf32>
    %130 = vector.extract_strided_slice %127 {offsets = [0, 96], sizes = [8, 32], strides = [1, 1]} : vector<8x128xf32> to vector<8x32xf32>
    %131 = vector.extract_strided_slice %122 {offsets = [0, 64], sizes = [8, 32], strides = [1, 1]} : vector<8x128xf32> to vector<8x32xf32>
    %132 = math.tanh %131 : vector<8x32xf32>
    %133 = arith.mulf %129, %94 : vector<8x32xf32>
    %134 = arith.mulf %128, %132 : vector<8x32xf32>
    %135 = arith.addf %133, %134 : vector<8x32xf32>
    %136 = math.tanh %135 : vector<8x32xf32>
    %137 = arith.mulf %130, %136 : vector<8x32xf32>
    %c24 = arith.constant 24 : index
    %c0_38 = arith.constant 0 : index
    %138 = vector.load %arg11[%c24, %c0_38] : memref<64x128xf32, #tpu.memory_space<vmem>>, vector<8x128xf32>
    %139 = arith.truncf %115 : vector<8x32xf32> to vector<8x32xbf16>
    %cst_39 = arith.constant dense<0.000000e+00> : vector<8x128xf32>
    %140 = tpu.matmul %139, %7, %cst_39 {dimension_numbers = #tpu.dot_dimension_numbers<[1], [0], [0], [1], [0, 0, 1, 1], [], []>} : vector<8x32xbf16>, vector<32x128xbf16>, vector<8x128xf32> -> vector<8x128xf32>
    %141 = arith.addf %138, %140 : vector<8x128xf32>
    %142 = arith.negf %141 : vector<8x128xf32>
    %143 = math.exp %142 : vector<8x128xf32>
    %cst_40 = arith.constant 1.000000e+00 : f32
    %144 = vector.broadcast %cst_40 : f32 to vector<8x128xf32>
    %145 = arith.addf %144, %143 : vector<8x128xf32>
    %146 = arith.divf %144, %145 : vector<8x128xf32>
    %147 = vector.extract_strided_slice %146 {offsets = [0, 0], sizes = [8, 32], strides = [1, 1]} : vector<8x128xf32> to vector<8x32xf32>
    %148 = vector.extract_strided_slice %146 {offsets = [0, 32], sizes = [8, 32], strides = [1, 1]} : vector<8x128xf32> to vector<8x32xf32>
    %149 = vector.extract_strided_slice %146 {offsets = [0, 96], sizes = [8, 32], strides = [1, 1]} : vector<8x128xf32> to vector<8x32xf32>
    %150 = vector.extract_strided_slice %141 {offsets = [0, 64], sizes = [8, 32], strides = [1, 1]} : vector<8x128xf32> to vector<8x32xf32>
    %151 = math.tanh %150 : vector<8x32xf32>
    %152 = arith.mulf %148, %113 : vector<8x32xf32>
    %153 = arith.mulf %147, %151 : vector<8x32xf32>
    %154 = arith.addf %152, %153 : vector<8x32xf32>
    %155 = math.tanh %154 : vector<8x32xf32>
    %156 = arith.mulf %149, %155 : vector<8x32xf32>
    %157 = arith.truncf %156 : vector<8x32xf32> to vector<8x32xbf16>
    %cst_41 = arith.constant dense<0.000000e+00> : vector<8x128xf32>
    %158 = tpu.matmul %157, %9, %cst_41 {dimension_numbers = #tpu.dot_dimension_numbers<[1], [0], [0], [1], [0, 0, 1, 1], [], []>} : vector<8x32xbf16>, vector<32x128xbf16>, vector<8x128xf32> -> vector<8x128xf32>
    %159 = arith.truncf %137 : vector<8x32xf32> to vector<8x32xbf16>
    %cst_42 = arith.constant dense<0.000000e+00> : vector<8x128xf32>
    %160 = tpu.matmul %159, %8, %cst_42 {dimension_numbers = #tpu.dot_dimension_numbers<[1], [0], [0], [1], [0, 0, 1, 1], [], []>} : vector<8x32xbf16>, vector<32x128xbf16>, vector<8x128xf32> -> vector<8x128xf32>
    %161 = arith.addf %158, %160 : vector<8x128xf32>
    %162 = vector.broadcast %10 : vector<1x128xf32> to vector<8x128xf32>
    %163 = arith.addf %161, %162 : vector<8x128xf32>
    %164 = arith.negf %163 : vector<8x128xf32>
    %165 = math.exp %164 : vector<8x128xf32>
    %cst_43 = arith.constant 1.000000e+00 : f32
    %166 = vector.broadcast %cst_43 : f32 to vector<8x128xf32>
    %167 = arith.addf %166, %165 : vector<8x128xf32>
    %168 = arith.divf %166, %167 : vector<8x128xf32>
    %169 = vector.extract_strided_slice %168 {offsets = [0, 0], sizes = [8, 32], strides = [1, 1]} : vector<8x128xf32> to vector<8x32xf32>
    %170 = vector.extract_strided_slice %168 {offsets = [0, 32], sizes = [8, 32], strides = [1, 1]} : vector<8x128xf32> to vector<8x32xf32>
    %171 = vector.extract_strided_slice %168 {offsets = [0, 96], sizes = [8, 32], strides = [1, 1]} : vector<8x128xf32> to vector<8x32xf32>
    %172 = vector.extract_strided_slice %163 {offsets = [0, 64], sizes = [8, 32], strides = [1, 1]} : vector<8x128xf32> to vector<8x32xf32>
    %173 = math.tanh %172 : vector<8x32xf32>
    %174 = arith.mulf %170, %135 : vector<8x32xf32>
    %175 = arith.mulf %169, %173 : vector<8x32xf32>
    %176 = arith.addf %174, %175 : vector<8x32xf32>
    %177 = math.tanh %176 : vector<8x32xf32>
    %178 = arith.mulf %171, %177 : vector<8x32xf32>
    %c32 = arith.constant 32 : index
    %c0_44 = arith.constant 0 : index
    %179 = vector.load %arg11[%c32, %c0_44] : memref<64x128xf32, #tpu.memory_space<vmem>>, vector<8x128xf32>
    %180 = arith.truncf %156 : vector<8x32xf32> to vector<8x32xbf16>
    %cst_45 = arith.constant dense<0.000000e+00> : vector<8x128xf32>
    %181 = tpu.matmul %180, %7, %cst_45 {dimension_numbers = #tpu.dot_dimension_numbers<[1], [0], [0], [1], [0, 0, 1, 1], [], []>} : vector<8x32xbf16>, vector<32x128xbf16>, vector<8x128xf32> -> vector<8x128xf32>
    %182 = arith.addf %179, %181 : vector<8x128xf32>
    %183 = arith.negf %182 : vector<8x128xf32>
    %184 = math.exp %183 : vector<8x128xf32>
    %cst_46 = arith.constant 1.000000e+00 : f32
    %185 = vector.broadcast %cst_46 : f32 to vector<8x128xf32>
    %186 = arith.addf %185, %184 : vector<8x128xf32>
    %187 = arith.divf %185, %186 : vector<8x128xf32>
    %188 = vector.extract_strided_slice %187 {offsets = [0, 0], sizes = [8, 32], strides = [1, 1]} : vector<8x128xf32> to vector<8x32xf32>
    %189 = vector.extract_strided_slice %187 {offsets = [0, 32], sizes = [8, 32], strides = [1, 1]} : vector<8x128xf32> to vector<8x32xf32>
    %190 = vector.extract_strided_slice %187 {offsets = [0, 96], sizes = [8, 32], strides = [1, 1]} : vector<8x128xf32> to vector<8x32xf32>
    %191 = vector.extract_strided_slice %182 {offsets = [0, 64], sizes = [8, 32], strides = [1, 1]} : vector<8x128xf32> to vector<8x32xf32>
    %192 = math.tanh %191 : vector<8x32xf32>
    %193 = arith.mulf %189, %154 : vector<8x32xf32>
    %194 = arith.mulf %188, %192 : vector<8x32xf32>
    %195 = arith.addf %193, %194 : vector<8x32xf32>
    %196 = math.tanh %195 : vector<8x32xf32>
    %197 = arith.mulf %190, %196 : vector<8x32xf32>
    %198 = arith.truncf %197 : vector<8x32xf32> to vector<8x32xbf16>
    %cst_47 = arith.constant dense<0.000000e+00> : vector<8x128xf32>
    %199 = tpu.matmul %198, %9, %cst_47 {dimension_numbers = #tpu.dot_dimension_numbers<[1], [0], [0], [1], [0, 0, 1, 1], [], []>} : vector<8x32xbf16>, vector<32x128xbf16>, vector<8x128xf32> -> vector<8x128xf32>
    %200 = arith.truncf %178 : vector<8x32xf32> to vector<8x32xbf16>
    %cst_48 = arith.constant dense<0.000000e+00> : vector<8x128xf32>
    %201 = tpu.matmul %200, %8, %cst_48 {dimension_numbers = #tpu.dot_dimension_numbers<[1], [0], [0], [1], [0, 0, 1, 1], [], []>} : vector<8x32xbf16>, vector<32x128xbf16>, vector<8x128xf32> -> vector<8x128xf32>
    %202 = arith.addf %199, %201 : vector<8x128xf32>
    %203 = vector.broadcast %10 : vector<1x128xf32> to vector<8x128xf32>
    %204 = arith.addf %202, %203 : vector<8x128xf32>
    %205 = arith.negf %204 : vector<8x128xf32>
    %206 = math.exp %205 : vector<8x128xf32>
    %cst_49 = arith.constant 1.000000e+00 : f32
    %207 = vector.broadcast %cst_49 : f32 to vector<8x128xf32>
    %208 = arith.addf %207, %206 : vector<8x128xf32>
    %209 = arith.divf %207, %208 : vector<8x128xf32>
    %210 = vector.extract_strided_slice %209 {offsets = [0, 0], sizes = [8, 32], strides = [1, 1]} : vector<8x128xf32> to vector<8x32xf32>
    %211 = vector.extract_strided_slice %209 {offsets = [0, 32], sizes = [8, 32], strides = [1, 1]} : vector<8x128xf32> to vector<8x32xf32>
    %212 = vector.extract_strided_slice %209 {offsets = [0, 96], sizes = [8, 32], strides = [1, 1]} : vector<8x128xf32> to vector<8x32xf32>
    %213 = vector.extract_strided_slice %204 {offsets = [0, 64], sizes = [8, 32], strides = [1, 1]} : vector<8x128xf32> to vector<8x32xf32>
    %214 = math.tanh %213 : vector<8x32xf32>
    %215 = arith.mulf %211, %176 : vector<8x32xf32>
    %216 = arith.mulf %210, %214 : vector<8x32xf32>
    %217 = arith.addf %215, %216 : vector<8x32xf32>
    %218 = math.tanh %217 : vector<8x32xf32>
    %219 = arith.mulf %212, %218 : vector<8x32xf32>
    %c40 = arith.constant 40 : index
    %c0_50 = arith.constant 0 : index
    %220 = vector.load %arg11[%c40, %c0_50] : memref<64x128xf32, #tpu.memory_space<vmem>>, vector<8x128xf32>
    %221 = arith.truncf %197 : vector<8x32xf32> to vector<8x32xbf16>
    %cst_51 = arith.constant dense<0.000000e+00> : vector<8x128xf32>
    %222 = tpu.matmul %221, %7, %cst_51 {dimension_numbers = #tpu.dot_dimension_numbers<[1], [0], [0], [1], [0, 0, 1, 1], [], []>} : vector<8x32xbf16>, vector<32x128xbf16>, vector<8x128xf32> -> vector<8x128xf32>
    %223 = arith.addf %220, %222 : vector<8x128xf32>
    %224 = arith.negf %223 : vector<8x128xf32>
    %225 = math.exp %224 : vector<8x128xf32>
    %cst_52 = arith.constant 1.000000e+00 : f32
    %226 = vector.broadcast %cst_52 : f32 to vector<8x128xf32>
    %227 = arith.addf %226, %225 : vector<8x128xf32>
    %228 = arith.divf %226, %227 : vector<8x128xf32>
    %229 = vector.extract_strided_slice %228 {offsets = [0, 0], sizes = [8, 32], strides = [1, 1]} : vector<8x128xf32> to vector<8x32xf32>
    %230 = vector.extract_strided_slice %228 {offsets = [0, 32], sizes = [8, 32], strides = [1, 1]} : vector<8x128xf32> to vector<8x32xf32>
    %231 = vector.extract_strided_slice %228 {offsets = [0, 96], sizes = [8, 32], strides = [1, 1]} : vector<8x128xf32> to vector<8x32xf32>
    %232 = vector.extract_strided_slice %223 {offsets = [0, 64], sizes = [8, 32], strides = [1, 1]} : vector<8x128xf32> to vector<8x32xf32>
    %233 = math.tanh %232 : vector<8x32xf32>
    %234 = arith.mulf %230, %195 : vector<8x32xf32>
    %235 = arith.mulf %229, %233 : vector<8x32xf32>
    %236 = arith.addf %234, %235 : vector<8x32xf32>
    %237 = math.tanh %236 : vector<8x32xf32>
    %238 = arith.mulf %231, %237 : vector<8x32xf32>
    %239 = arith.truncf %238 : vector<8x32xf32> to vector<8x32xbf16>
    %cst_53 = arith.constant dense<0.000000e+00> : vector<8x128xf32>
    %240 = tpu.matmul %239, %9, %cst_53 {dimension_numbers = #tpu.dot_dimension_numbers<[1], [0], [0], [1], [0, 0, 1, 1], [], []>} : vector<8x32xbf16>, vector<32x128xbf16>, vector<8x128xf32> -> vector<8x128xf32>
    %241 = arith.truncf %219 : vector<8x32xf32> to vector<8x32xbf16>
    %cst_54 = arith.constant dense<0.000000e+00> : vector<8x128xf32>
    %242 = tpu.matmul %241, %8, %cst_54 {dimension_numbers = #tpu.dot_dimension_numbers<[1], [0], [0], [1], [0, 0, 1, 1], [], []>} : vector<8x32xbf16>, vector<32x128xbf16>, vector<8x128xf32> -> vector<8x128xf32>
    %243 = arith.addf %240, %242 : vector<8x128xf32>
    %244 = vector.broadcast %10 : vector<1x128xf32> to vector<8x128xf32>
    %245 = arith.addf %243, %244 : vector<8x128xf32>
    %246 = arith.negf %245 : vector<8x128xf32>
    %247 = math.exp %246 : vector<8x128xf32>
    %cst_55 = arith.constant 1.000000e+00 : f32
    %248 = vector.broadcast %cst_55 : f32 to vector<8x128xf32>
    %249 = arith.addf %248, %247 : vector<8x128xf32>
    %250 = arith.divf %248, %249 : vector<8x128xf32>
    %251 = vector.extract_strided_slice %250 {offsets = [0, 0], sizes = [8, 32], strides = [1, 1]} : vector<8x128xf32> to vector<8x32xf32>
    %252 = vector.extract_strided_slice %250 {offsets = [0, 32], sizes = [8, 32], strides = [1, 1]} : vector<8x128xf32> to vector<8x32xf32>
    %253 = vector.extract_strided_slice %250 {offsets = [0, 96], sizes = [8, 32], strides = [1, 1]} : vector<8x128xf32> to vector<8x32xf32>
    %254 = vector.extract_strided_slice %245 {offsets = [0, 64], sizes = [8, 32], strides = [1, 1]} : vector<8x128xf32> to vector<8x32xf32>
    %255 = math.tanh %254 : vector<8x32xf32>
    %256 = arith.mulf %252, %217 : vector<8x32xf32>
    %257 = arith.mulf %251, %255 : vector<8x32xf32>
    %258 = arith.addf %256, %257 : vector<8x32xf32>
    %259 = math.tanh %258 : vector<8x32xf32>
    %260 = arith.mulf %253, %259 : vector<8x32xf32>
    %c48 = arith.constant 48 : index
    %c0_56 = arith.constant 0 : index
    %261 = vector.load %arg11[%c48, %c0_56] : memref<64x128xf32, #tpu.memory_space<vmem>>, vector<8x128xf32>
    %262 = arith.truncf %238 : vector<8x32xf32> to vector<8x32xbf16>
    %cst_57 = arith.constant dense<0.000000e+00> : vector<8x128xf32>
    %263 = tpu.matmul %262, %7, %cst_57 {dimension_numbers = #tpu.dot_dimension_numbers<[1], [0], [0], [1], [0, 0, 1, 1], [], []>} : vector<8x32xbf16>, vector<32x128xbf16>, vector<8x128xf32> -> vector<8x128xf32>
    %264 = arith.addf %261, %263 : vector<8x128xf32>
    %265 = arith.negf %264 : vector<8x128xf32>
    %266 = math.exp %265 : vector<8x128xf32>
    %cst_58 = arith.constant 1.000000e+00 : f32
    %267 = vector.broadcast %cst_58 : f32 to vector<8x128xf32>
    %268 = arith.addf %267, %266 : vector<8x128xf32>
    %269 = arith.divf %267, %268 : vector<8x128xf32>
    %270 = vector.extract_strided_slice %269 {offsets = [0, 0], sizes = [8, 32], strides = [1, 1]} : vector<8x128xf32> to vector<8x32xf32>
    %271 = vector.extract_strided_slice %269 {offsets = [0, 32], sizes = [8, 32], strides = [1, 1]} : vector<8x128xf32> to vector<8x32xf32>
    %272 = vector.extract_strided_slice %269 {offsets = [0, 96], sizes = [8, 32], strides = [1, 1]} : vector<8x128xf32> to vector<8x32xf32>
    %273 = vector.extract_strided_slice %264 {offsets = [0, 64], sizes = [8, 32], strides = [1, 1]} : vector<8x128xf32> to vector<8x32xf32>
    %274 = math.tanh %273 : vector<8x32xf32>
    %275 = arith.mulf %271, %236 : vector<8x32xf32>
    %276 = arith.mulf %270, %274 : vector<8x32xf32>
    %277 = arith.addf %275, %276 : vector<8x32xf32>
    %278 = math.tanh %277 : vector<8x32xf32>
    %279 = arith.mulf %272, %278 : vector<8x32xf32>
    %280 = arith.truncf %279 : vector<8x32xf32> to vector<8x32xbf16>
    %cst_59 = arith.constant dense<0.000000e+00> : vector<8x128xf32>
    %281 = tpu.matmul %280, %9, %cst_59 {dimension_numbers = #tpu.dot_dimension_numbers<[1], [0], [0], [1], [0, 0, 1, 1], [], []>} : vector<8x32xbf16>, vector<32x128xbf16>, vector<8x128xf32> -> vector<8x128xf32>
    %282 = arith.truncf %260 : vector<8x32xf32> to vector<8x32xbf16>
    %cst_60 = arith.constant dense<0.000000e+00> : vector<8x128xf32>
    %283 = tpu.matmul %282, %8, %cst_60 {dimension_numbers = #tpu.dot_dimension_numbers<[1], [0], [0], [1], [0, 0, 1, 1], [], []>} : vector<8x32xbf16>, vector<32x128xbf16>, vector<8x128xf32> -> vector<8x128xf32>
    %284 = arith.addf %281, %283 : vector<8x128xf32>
    %285 = vector.broadcast %10 : vector<1x128xf32> to vector<8x128xf32>
    %286 = arith.addf %284, %285 : vector<8x128xf32>
    %287 = arith.negf %286 : vector<8x128xf32>
    %288 = math.exp %287 : vector<8x128xf32>
    %cst_61 = arith.constant 1.000000e+00 : f32
    %289 = vector.broadcast %cst_61 : f32 to vector<8x128xf32>
    %290 = arith.addf %289, %288 : vector<8x128xf32>
    %291 = arith.divf %289, %290 : vector<8x128xf32>
    %292 = vector.extract_strided_slice %291 {offsets = [0, 0], sizes = [8, 32], strides = [1, 1]} : vector<8x128xf32> to vector<8x32xf32>
    %293 = vector.extract_strided_slice %291 {offsets = [0, 32], sizes = [8, 32], strides = [1, 1]} : vector<8x128xf32> to vector<8x32xf32>
    %294 = vector.extract_strided_slice %291 {offsets = [0, 96], sizes = [8, 32], strides = [1, 1]} : vector<8x128xf32> to vector<8x32xf32>
    %295 = vector.extract_strided_slice %286 {offsets = [0, 64], sizes = [8, 32], strides = [1, 1]} : vector<8x128xf32> to vector<8x32xf32>
    %296 = math.tanh %295 : vector<8x32xf32>
    %297 = arith.mulf %293, %258 : vector<8x32xf32>
    %298 = arith.mulf %292, %296 : vector<8x32xf32>
    %299 = arith.addf %297, %298 : vector<8x32xf32>
    %300 = math.tanh %299 : vector<8x32xf32>
    %301 = arith.mulf %294, %300 : vector<8x32xf32>
    %c56 = arith.constant 56 : index
    %c0_62 = arith.constant 0 : index
    %302 = vector.load %arg11[%c56, %c0_62] : memref<64x128xf32, #tpu.memory_space<vmem>>, vector<8x128xf32>
    %303 = arith.truncf %279 : vector<8x32xf32> to vector<8x32xbf16>
    %cst_63 = arith.constant dense<0.000000e+00> : vector<8x128xf32>
    %304 = tpu.matmul %303, %7, %cst_63 {dimension_numbers = #tpu.dot_dimension_numbers<[1], [0], [0], [1], [0, 0, 1, 1], [], []>} : vector<8x32xbf16>, vector<32x128xbf16>, vector<8x128xf32> -> vector<8x128xf32>
    %305 = arith.addf %302, %304 : vector<8x128xf32>
    %306 = arith.negf %305 : vector<8x128xf32>
    %307 = math.exp %306 : vector<8x128xf32>
    %cst_64 = arith.constant 1.000000e+00 : f32
    %308 = vector.broadcast %cst_64 : f32 to vector<8x128xf32>
    %309 = arith.addf %308, %307 : vector<8x128xf32>
    %310 = arith.divf %308, %309 : vector<8x128xf32>
    %311 = vector.extract_strided_slice %310 {offsets = [0, 0], sizes = [8, 32], strides = [1, 1]} : vector<8x128xf32> to vector<8x32xf32>
    %312 = vector.extract_strided_slice %310 {offsets = [0, 32], sizes = [8, 32], strides = [1, 1]} : vector<8x128xf32> to vector<8x32xf32>
    %313 = vector.extract_strided_slice %310 {offsets = [0, 96], sizes = [8, 32], strides = [1, 1]} : vector<8x128xf32> to vector<8x32xf32>
    %314 = vector.extract_strided_slice %305 {offsets = [0, 64], sizes = [8, 32], strides = [1, 1]} : vector<8x128xf32> to vector<8x32xf32>
    %315 = math.tanh %314 : vector<8x32xf32>
    %316 = arith.mulf %312, %277 : vector<8x32xf32>
    %317 = arith.mulf %311, %315 : vector<8x32xf32>
    %318 = arith.addf %316, %317 : vector<8x32xf32>
    %319 = math.tanh %318 : vector<8x32xf32>
    %320 = arith.mulf %313, %319 : vector<8x32xf32>
    %321 = arith.truncf %320 : vector<8x32xf32> to vector<8x32xbf16>
    %cst_65 = arith.constant dense<0.000000e+00> : vector<8x128xf32>
    %322 = tpu.matmul %321, %9, %cst_65 {dimension_numbers = #tpu.dot_dimension_numbers<[1], [0], [0], [1], [0, 0, 1, 1], [], []>} : vector<8x32xbf16>, vector<32x128xbf16>, vector<8x128xf32> -> vector<8x128xf32>
    %323 = arith.truncf %301 : vector<8x32xf32> to vector<8x32xbf16>
    %cst_66 = arith.constant dense<0.000000e+00> : vector<8x128xf32>
    %324 = tpu.matmul %323, %8, %cst_66 {dimension_numbers = #tpu.dot_dimension_numbers<[1], [0], [0], [1], [0, 0, 1, 1], [], []>} : vector<8x32xbf16>, vector<32x128xbf16>, vector<8x128xf32> -> vector<8x128xf32>
    %325 = arith.addf %322, %324 : vector<8x128xf32>
    %326 = vector.broadcast %10 : vector<1x128xf32> to vector<8x128xf32>
    %327 = arith.addf %325, %326 : vector<8x128xf32>
    %328 = arith.negf %327 : vector<8x128xf32>
    %329 = math.exp %328 : vector<8x128xf32>
    %cst_67 = arith.constant 1.000000e+00 : f32
    %330 = vector.broadcast %cst_67 : f32 to vector<8x128xf32>
    %331 = arith.addf %330, %329 : vector<8x128xf32>
    %332 = arith.divf %330, %331 : vector<8x128xf32>
    %333 = vector.extract_strided_slice %332 {offsets = [0, 0], sizes = [8, 32], strides = [1, 1]} : vector<8x128xf32> to vector<8x32xf32>
    %334 = vector.extract_strided_slice %332 {offsets = [0, 32], sizes = [8, 32], strides = [1, 1]} : vector<8x128xf32> to vector<8x32xf32>
    %335 = vector.extract_strided_slice %332 {offsets = [0, 96], sizes = [8, 32], strides = [1, 1]} : vector<8x128xf32> to vector<8x32xf32>
    %336 = vector.extract_strided_slice %327 {offsets = [0, 64], sizes = [8, 32], strides = [1, 1]} : vector<8x128xf32> to vector<8x32xf32>
    %337 = math.tanh %336 : vector<8x32xf32>
    %338 = arith.mulf %334, %299 : vector<8x32xf32>
    %339 = arith.mulf %333, %337 : vector<8x32xf32>
    %340 = arith.addf %338, %339 : vector<8x32xf32>
    %341 = math.tanh %340 : vector<8x32xf32>
    %342 = arith.mulf %335, %341 : vector<8x32xf32>
    %343 = arith.truncf %342 : vector<8x32xf32> to vector<8x32xbf16>
    %c0_68 = arith.constant 0 : index
    %c0_69 = arith.constant 0 : index
    %344 = vector.load %arg8[%c0_68, %c0_69] : memref<32x128xbf16, #tpu.memory_space<vmem>>, vector<32x128xbf16>
    %cst_70 = arith.constant dense<0.000000e+00> : vector<8x128xf32>
    %345 = tpu.matmul %343, %344, %cst_70 {dimension_numbers = #tpu.dot_dimension_numbers<[1], [0], [0], [1], [0, 0, 1, 1], [], []>} : vector<8x32xbf16>, vector<32x128xbf16>, vector<8x128xf32> -> vector<8x128xf32>
    %c0_71 = arith.constant 0 : index
    %c0_72 = arith.constant 0 : index
    %346 = vector.load %arg9[%c0_71, %c0_72] : memref<1x128xf32, #tpu.memory_space<vmem>>, vector<1x128xf32>
    %347 = vector.broadcast %346 : vector<1x128xf32> to vector<8x128xf32>
    %348 = arith.addf %345, %347 : vector<8x128xf32>
    %c0_73 = arith.constant 0 : index
    %c0_74 = arith.constant 0 : index
    %349 = vector.load %arg10[%c0_73, %c0_74] : memref<8x128xf32, #tpu.memory_space<vmem>>, vector<8x128xf32>
    tpu.vector_store %arg10[%c0_73, %c0_74], %348 {strides = array<i32>} : memref<8x128xf32, #tpu.memory_space<vmem>>, vector<8x128xf32>,
    return
  }
  func.func @transform_0(%arg0: i32) -> (i32, i32) {
    %c0_i32 = arith.constant 0 : i32
    %c0_i32_0 = arith.constant 0 : i32
    %c0_i32_1 = arith.constant 0 : i32
    return %c0_i32, %c0_i32_0 : i32, i32
  }
  func.func @transform_1(%arg0: i32) -> (i32, i32) {
    %c0_i32 = arith.constant 0 : i32
    %c0_i32_0 = arith.constant 0 : i32
    %c0_i32_1 = arith.constant 0 : i32
    return %c0_i32, %c0_i32_0 : i32, i32
  }
  func.func @transform_2(%arg0: i32) -> (i32, i32) {
    %c0_i32 = arith.constant 0 : i32
    %c0_i32_0 = arith.constant 0 : i32
    %c0_i32_1 = arith.constant 0 : i32
    return %c0_i32, %c0_i32_0 : i32, i32
  }
  func.func @transform_3(%arg0: i32) -> (i32, i32) {
    %c0_i32 = arith.constant 0 : i32
    %c0_i32_0 = arith.constant 0 : i32
    %c0_i32_1 = arith.constant 0 : i32
    return %c0_i32, %c0_i32_0 : i32, i32
  }
  func.func @transform_4(%arg0: i32) -> (i32, i32) {
    %c0_i32 = arith.constant 0 : i32
    %c0_i32_0 = arith.constant 0 : i32
    %c0_i32_1 = arith.constant 0 : i32
    return %c0_i32, %c0_i32_0 : i32, i32
  }
  func.func @transform_5(%arg0: i32) -> (i32, i32) {
    %c0_i32 = arith.constant 0 : i32
    %c0_i32_0 = arith.constant 0 : i32
    %c0_i32_1 = arith.constant 0 : i32
    return %c0_i32, %c0_i32_0 : i32, i32
  }
  func.func @transform_6(%arg0: i32) -> (i32, i32) {
    %c0_i32 = arith.constant 0 : i32
    %c0_i32_0 = arith.constant 0 : i32
    %c0_i32_1 = arith.constant 0 : i32
    return %c0_i32, %c0_i32_0 : i32, i32
  }
  func.func @transform_7(%arg0: i32) -> (i32, i32) {
    %c0_i32 = arith.constant 0 : i32
    %c0_i32_0 = arith.constant 0 : i32
    %c0_i32_1 = arith.constant 0 : i32
    return %c0_i32, %c0_i32_0 : i32, i32
  }
  func.func @transform_8(%arg0: i32) -> (i32, i32) {
    %c0_i32 = arith.constant 0 : i32
    %c0_i32_0 = arith.constant 0 : i32
    %c0_i32_1 = arith.constant 0 : i32
    return %c0_i32, %c0_i32_0 : i32, i32
  }
  func.func @transform_9(%arg0: i32) -> (i32, i32) {
    %c0_i32 = arith.constant 0 : i32
    %c0_i32_0 = arith.constant 0 : i32
    %c0_i32_1 = arith.constant 0 : i32
    return %c0_i32, %c0_i32_0 : i32, i32
  }
}

</mosaic_0001>

<llo_original>
// kernel: _forward_impl.1
$region0: #{_forward_impl.1}
  #allocation0 [shape = 'u32[]', space=smem, size = 0x4, offset = 0x4, fixed_abs, tag = 'smem constant byte address 0x4 - core index']
  #allocation1 [shape = 'u32[144,128]{1,0:T(1,128)}', space=vmem, size = 0x12000, scoped, tag = 'internal scratch']
  #allocation2 [shape = 'f32[64,128]{1,0:T(8,128)}', space=vmem, size = 0x8000, scoped, tag = 'scratch operand']
  %s0 = inlined_call_operand.vmem [shape: bf16[64,16], index: 0, kind: input, shape index: {}]
  %s1 = inlined_call_operand.vmem [shape: bf16[16,128], index: 1, kind: input, shape index: {}]
  %s2 = inlined_call_operand.vmem [shape: bf16[32,128], index: 2, kind: input, shape index: {}]
  %s3 = inlined_call_operand.vmem [shape: f32[1,128], index: 3, kind: input, shape index: {}]
  %s4 = inlined_call_operand.vmem [shape: bf16[32,128], index: 4, kind: input, shape index: {}]
  %s5 = inlined_call_operand.vmem [shape: bf16[32,128], index: 5, kind: input, shape index: {}]
  %s6 = inlined_call_operand.vmem [shape: f32[1,128], index: 6, kind: input, shape index: {}]
  %s7 = inlined_call_operand.vmem [shape: bf16[32,128], index: 7, kind: input, shape index: {}]
  %s8 = inlined_call_operand.vmem [shape: f32[1,128], index: 8, kind: input, shape index: {}]
  %s9 = inlined_call_operand.vmem [shape: f32[8,128], index: 9, kind: output, shape index: {}]
  %s10 = sld [smem:[#allocation0]]
  $region46: #{_forward_impl.1} parent=0
    _
  %s12 = ssub.s32 1, %s10
  %s13 = scalar_select 0, %s12, %s10
  // Predicated region
  $region2: #{_forward_impl.1} parent=0 // pred_check
    _
  $region3: #{_forward_impl.1} parent=0 // pred_check_branch
    %15 = sbr.rel (0) target = $region5
  $region4: #{_forward_impl.1} parent=0 // pred_region
    _
  $region5: #{_forward_impl.1} parent=0 // pred_fallthru
    _
  // Predicated region
  $region6: #{_forward_impl.1} parent=0 // pred_check
    _
  $region7: #{_forward_impl.1} parent=0 // pred_check_branch
    %17 = sbr.rel (0) target = $region9
  $region8: #{_forward_impl.1} parent=0 // pred_region
    _
  $region9: #{_forward_impl.1} parent=0 // pred_fallthru
    _
  // Predicated region
  $region10: #{_forward_impl.1} parent=0 // pred_check
    _
  $region11: #{_forward_impl.1} parent=0 // pred_check_branch
    %19 = sbr.rel (0) target = $region13
  $region12: #{_forward_impl.1} parent=0 // pred_region
    _
  $region13: #{_forward_impl.1} parent=0 // pred_fallthru
    _
  // Predicated region
  $region14: #{_forward_impl.1} parent=0 // pred_check
    _
  $region15: #{_forward_impl.1} parent=0 // pred_check_branch
    %21 = sbr.rel (0) target = $region17
  $region16: #{_forward_impl.1} parent=0 // pred_region
    _
  $region17: #{_forward_impl.1} parent=0 // pred_fallthru
    _
  // Predicated region
  $region18: #{_forward_impl.1} parent=0 // pred_check
    _
  $region19: #{_forward_impl.1} parent=0 // pred_check_branch
    %23 = sbr.rel (0) target = $region21
  $region20: #{_forward_impl.1} parent=0 // pred_region
    _
  $region21: #{_forward_impl.1} parent=0 // pred_fallthru
    _
  // Predicated region
  $region22: #{_forward_impl.1} parent=0 // pred_check
    _
  $region23: #{_forward_impl.1} parent=0 // pred_check_branch
    %25 = sbr.rel (0) target = $region25
  $region24: #{_forward_impl.1} parent=0 // pred_region
    _
  $region25: #{_forward_impl.1} parent=0 // pred_fallthru
    _
  // Predicated region
  $region26: #{_forward_impl.1} parent=0 // pred_check
    _
  $region27: #{_forward_impl.1} parent=0 // pred_check_branch
    %27 = sbr.rel (0) target = $region29
  $region28: #{_forward_impl.1} parent=0 // pred_region
    _
  $region29: #{_forward_impl.1} parent=0 // pred_fallthru
    _
  // Predicated region
  $region30: #{_forward_impl.1} parent=0 // pred_check
    _
  $region31: #{_forward_impl.1} parent=0 // pred_check_branch
    %29 = sbr.rel (0) target = $region33
  $region32: #{_forward_impl.1} parent=0 // pred_region
    _
  $region33: #{_forward_impl.1} parent=0 // pred_fallthru
    _
  // Predicated region
  $region34: #{_forward_impl.1} parent=0 // pred_check
    _
  $region35: #{_forward_impl.1} parent=0 // pred_check_branch
    %31 = sbr.rel (0) target = $region37
  $region36: #{_forward_impl.1} parent=0 // pred_region
    _
  $region37: #{_forward_impl.1} parent=0 // pred_fallthru
    _
  %v33 = vld [vmem:[%s0] sm:$0xf]
  %v34 = vld [vmem:[%s0 + $0x4] sm:$0xf]
  %v35 = vld [vmem:[%s0 + $0x8] sm:$0xf]
  %v36 = vld [vmem:[%s0 + $0xc] sm:$0xf]
  %v37 = vld [vmem:[%s0 + $0x10] sm:$0xf]
  %v38 = vld [vmem:[%s0 + $0x14] sm:$0xf]
  %v39 = vld [vmem:[%s0 + $0x18] sm:$0xf]
  %v40 = vld [vmem:[%s0 + $0x1c] sm:$0xf]
  %v41 = vld [vmem:[%s1] sm:$0xf]
  %v42 = vld [vmem:[%s1 + $0x4] sm:$0xf]
  %v43 = vld [vmem:[%s3] sm:$0x1]
  %v45 = vlaneseq
  %v46 = vshrl.u32 %v45, 7
  %v47 = vsub.s32 0, %v46
  %v48 = vrot.slane %v43, %v47
  %v58 = vunpack.c.l.b16 %v33
  %v59 = vunpack.c.l.b16 %v34
  %v60 = vunpack.c.l.b16 %v35
  %v61 = vunpack.c.l.b16 %v36
  %v62 = vunpack.c.l.b16 %v37
  %v63 = vunpack.c.l.b16 %v38
  %v64 = vunpack.c.l.b16 %v39
  %v65 = vunpack.c.l.b16 %v40
  %v66 = vpack.c.b16 %v59, %v58
  %v67 = vpack.c.b16 %v61, %v60
  %v68 = vpack.c.b16 %v63, %v62
  %v69 = vpack.c.b16 %v65, %v64
  %v72 = vunpack.c.l.b16 %v41
  %v73 = vunpack.c.l.b16 %v42
  %v74 = vpack.c.b16 %v73, %v72
  %vm76 = vcmask 130048
  %v78 = vsel %vm76, %v66, 0
  %v81 = vsel %vm76, %v67, 0
  %v84 = vsel %vm76, %v68, 0
  %v87 = vsel %vm76, %v69, 0
  %89 = vmatprep.subr.bf16.mxu0 0
  %90 = vmatpush1.bf16.msra.mxu0 %v74
  %91 = vmatprep.subr.bf16.mxu0 0
  %92 = vmatpush1.bf16.msra.mxu0 0
  %93 = vmatprep.subr.bf16.mxu0 0
  %94 = vmatpush1.bf16.msra.mxu0 0
  %95 = vmatprep.subr.bf16.mxu0 0
  %96 = vmatpush1.bf16.msra.mxu0 0
  %97 = vmatprep.subr.bf16.mxu0 0
  %98 = vmatpush1.bf16.msra.mxu0 0
  %99 = vmatprep.subr.bf16.mxu0 0
  %100 = vmatpush1.bf16.msra.mxu0 0
  %101 = vmatprep.subr.bf16.mxu0 0
  %102 = vmatpush1.bf16.msra.mxu0 0
  %103 = vmatprep.subr.bf16.mxu0 0
  %104 = vmatpush1.bf16.msra.mxu0 0
  %105 = vmatprep.subr.bf16.mxu0 0
  %106 = vmatpush1.bf16.msra.mxu0 0
  %107 = vmatprep.subr.bf16.mxu0 0
  %108 = vmatpush1.bf16.msra.mxu0 0
  %109 = vmatprep.subr.bf16.mxu0 0
  %110 = vmatpush1.bf16.msra.mxu0 0
  %111 = vmatprep.subr.bf16.mxu0 0
  %112 = vmatpush1.bf16.msra.mxu0 0
  %113 = vmatprep.subr.bf16.mxu0 0
  %114 = vmatpush1.bf16.msra.mxu0 0
  %115 = vmatprep.subr.bf16.mxu0 0
  %116 = vmatpush1.bf16.msra.mxu0 0
  %117 = vmatprep.subr.bf16.mxu0 0
  %118 = vmatpush1.bf16.msra.mxu0 0
  %119 = vmatprep.subr.bf16.mxu0 0
  %120 = vmatpush1.bf16.msra.mxu0 0
  %121 = vmatprep.mubr.bf16.mxu0 0
  %122 = vmatmul.mubr.bf16.gmra.mrb[0].mxu0 %v78
  %v123 = vpop.f32.mrb[0].mxu0
  %v124 = vadd.f32 %v48, %v123
  %v125 = vpop.f32.mrb[0].mxu0
  %v126 = vpop.f32.mrb[0].mxu0
  %v127 = vadd.f32 %v48, %v126
  %v128 = vpop.f32.mrb[0].mxu0
  %129 = vmatprep.mubr.bf16.mxu0 0
  %130 = vmatmul.mubr.bf16.gmra.mrb[0].mxu0 %v81
  %v131 = vpop.f32.mrb[0].mxu0
  %v132 = vadd.f32 %v48, %v131
  %v133 = vpop.f32.mrb[0].mxu0
  %v134 = vpop.f32.mrb[0].mxu0
  %v135 = vadd.f32 %v48, %v134
  %v136 = vpop.f32.mrb[0].mxu0
  %137 = vmatprep.mubr.bf16.mxu0 0
  %138 = vmatmul.mubr.bf16.gmra.mrb[0].mxu0 %v84
  %v139 = vpop.f32.mrb[0].mxu0
  %v140 = vadd.f32 %v48, %v139
  %v141 = vpop.f32.mrb[0].mxu0
  %v142 = vpop.f32.mrb[0].mxu0
  %v143 = vadd.f32 %v48, %v142
  %v144 = vpop.f32.mrb[0].mxu0
  %145 = vmatprep.mubr.bf16.mxu0 0
  %146 = vmatmul.mubr.bf16.gmra.mrb[0].mxu0 %v87
  %v147 = vpop.f32.mrb[0].mxu0
  %v148 = vadd.f32 %v48, %v147
  %v149 = vpop.f32.mrb[0].mxu0
  %v150 = vpop.f32.mrb[0].mxu0
  %v151 = vadd.f32 %v48, %v150
  %v152 = vpop.f32.mrb[0].mxu0
  %153 = vdwg.mxu0
  %154 = vst [vmem:[#allocation2] sm:$0xff] %v124
  %155 = vst [vmem:[#allocation2 + $0x8] sm:$0xff] %v127
  %156 = vst [vmem:[#allocation2 + $0x10] sm:$0xff] %v132
  %157 = vst [vmem:[#allocation2 + $0x18] sm:$0xff] %v135
  %158 = vst [vmem:[#allocation2 + $0x20] sm:$0xff] %v140
  %159 = vst [vmem:[#allocation2 + $0x28] sm:$0xff] %v143
  %160 = vst [vmem:[#allocation2 + $0x30] sm:$0xff] %v148
  %161 = vst [vmem:[#allocation2 + $0x38] sm:$0xff] %v151
  %v162 = vld [vmem:[%s2] sm:$0xf]
  %v163 = vld [vmem:[%s2 + $0x4] sm:$0xf]
  %v164 = vld [vmem:[%s2 + $0x8] sm:$0xf]
  %v165 = vld [vmem:[%s2 + $0xc] sm:$0xf]
  %v166 = vld [vmem:[%s5] sm:$0xf]
  %v167 = vld [vmem:[%s5 + $0x4] sm:$0xf]
  %v168 = vld [vmem:[%s5 + $0x8] sm:$0xf]
  %v169 = vld [vmem:[%s5 + $0xc] sm:$0xf]
  %v170 = vld [vmem:[%s4] sm:$0xf]
  %v171 = vld [vmem:[%s4 + $0x4] sm:$0xf]
  %v172 = vld [vmem:[%s4 + $0x8] sm:$0xf]
  %v173 = vld [vmem:[%s4 + $0xc] sm:$0xf]
  %v174 = vld [vmem:[%s6] sm:$0x1]
  %v175 = vld [vmem:[#allocation2] sm:$0xff]
  %v180 = vunpack.c.l.b16 %v162
  %v181 = vunpack.c.l.b16 %v163
  %v182 = vunpack.c.l.b16 %v164
  %v183 = vunpack.c.l.b16 %v165
  %v184 = vpack.c.b16 %v181, %v180
  %v185 = vpack.c.b16 %v183, %v182
  %vm188 = vcmask 261120
  %v190 = vsel %vm188, 0, 0
  %192 = vmatprep.subr.bf16.mxu0 0
  %193 = vmatpush1.bf16.msra.mxu0 %v184
  %194 = vmatprep.subr.bf16.mxu0 0
  %195 = vmatpush1.bf16.msra.mxu0 %v185
  %196 = vmatprep.subr.bf16.mxu0 0
  %197 = vmatpush1.bf16.msra.mxu0 0
  %198 = vmatprep.subr.bf16.mxu0 0
  %199 = vmatpush1.bf16.msra.mxu0 0
  %200 = vmatprep.subr.bf16.mxu0 0
  %201 = vmatpush1.bf16.msra.mxu0 0
  %202 = vmatprep.subr.bf16.mxu0 0
  %203 = vmatpush1.bf16.msra.mxu0 0
  %204 = vmatprep.subr.bf16.mxu0 0
  %205 = vmatpush1.bf16.msra.mxu0 0
  %206 = vmatprep.subr.bf16.mxu0 0
  %207 = vmatpush1.bf16.msra.mxu0 0
  %208 = vmatprep.subr.bf16.mxu0 0
  %209 = vmatpush1.bf16.msra.mxu0 0
  %210 = vmatprep.subr.bf16.mxu0 0
  %211 = vmatpush1.bf16.msra.mxu0 0
  %212 = vmatprep.subr.bf16.mxu0 0
  %213 = vmatpush1.bf16.msra.mxu0 0
  %214 = vmatprep.subr.bf16.mxu0 0
  %215 = vmatpush1.bf16.msra.mxu0 0
  %216 = vmatprep.subr.bf16.mxu0 0
  %217 = vmatpush1.bf16.msra.mxu0 0
  %218 = vmatprep.subr.bf16.mxu0 0
  %219 = vmatpush1.bf16.msra.mxu0 0
  %220 = vmatprep.subr.bf16.mxu0 0
  %221 = vmatpush1.bf16.msra.mxu0 0
  %222 = vmatprep.subr.bf16.mxu0 0
  %223 = vmatpush1.bf16.msra.mxu0 0
  %224 = vmatprep.mubr.bf16.mxu0 0
  %225 = vmatmul.mubr.bf16.gmra.mrb[0].mxu0 %v190
  %v226 = vpop.f32.mrb[0].mxu0
  %v227 = vadd.f32 0.0, %v226
  %v228 = vpop.f32.mrb[0].mxu0
  %v229 = vpop.f32.mrb[0].mxu0
  %v230 = vpop.f32.mrb[0].mxu0
  %231 = vdwg.mxu0
  %v232 = vadd.f32 %v175, %v227
  %v233 = vxor.u32 %v232, 2147483648
  %v234 = vmul.f32 %v233, 1.442695
  %v235 = vpow.pop %v234
  %v236 = vadd.f32 %v235, 1.0
  %v237 = vrcp.pop %v236
  %v238 = vmul.f32 1.0, %v237
  %v239 = vtanh.pop %v232
  %v240 = vmul.f32 %v238, 0.0
  %242 = vrot.lane.b32.xlu0 %v239, 64
  %v243 = vpop.permute.xlu0 %242
  %v245 = vmul.f32 %v238, %v243
  %247 = vrot.lane.b32.xlu0 %v245, 32
  %v248 = vpop.permute.xlu0 %247
  %v250 = vadd.f32 %v240, %v248
  %v251 = vtanh.pop %v250
  %253 = vrot.lane.b32.xlu0 %v251, 64
  %v254 = vpop.permute.xlu0 %253
  %v256 = vmul.f32 %v238, %v254
  %v257 = vpack.c.bf16 %v256, %v256
  %v262 = vunpack.c.l.b16 %v166
  %v263 = vunpack.c.l.b16 %v167
  %v264 = vunpack.c.l.b16 %v168
  %v265 = vunpack.c.l.b16 %v169
  %v266 = vpack.c.b16 %v263, %v262
  %v267 = vpack.c.b16 %v265, %v264
  %270 = vmatprep.subr.bf16.mxu0 0
  %271 = vmatpush1.bf16.msra.mxu0 %v266
  %272 = vmatprep.subr.bf16.mxu0 0
  %273 = vmatpush1.bf16.msra.mxu0 %v267
  %274 = vmatprep.subr.bf16.mxu0 0
  %275 = vmatpush1.bf16.msra.mxu0 0
  %276 = vmatprep.subr.bf16.mxu0 0
  %277 = vmatpush1.bf16.msra.mxu0 0
  %278 = vmatprep.subr.bf16.mxu0 0
  %279 = vmatpush1.bf16.msra.mxu0 0
  %280 = vmatprep.subr.bf16.mxu0 0
  %281 = vmatpush1.bf16.msra.mxu0 0
  %282 = vmatprep.subr.bf16.mxu0 0
  %283 = vmatpush1.bf16.msra.mxu0 0
  %284 = vmatprep.subr.bf16.mxu0 0
  %285 = vmatpush1.bf16.msra.mxu0 0
  %286 = vmatprep.subr.bf16.mxu0 0
  %287 = vmatpush1.bf16.msra.mxu0 0
  %288 = vmatprep.subr.bf16.mxu0 0
  %289 = vmatpush1.bf16.msra.mxu0 0
  %290 = vmatprep.subr.bf16.mxu0 0
  %291 = vmatpush1.bf16.msra.mxu0 0
  %292 = vmatprep.subr.bf16.mxu0 0
  %293 = vmatpush1.bf16.msra.mxu0 0
  %294 = vmatprep.subr.bf16.mxu0 0
  %295 = vmatpush1.bf16.msra.mxu0 0
  %296 = vmatprep.subr.bf16.mxu0 0
  %297 = vmatpush1.bf16.msra.mxu0 0
  %298 = vmatprep.subr.bf16.mxu0 0
  %299 = vmatpush1.bf16.msra.mxu0 0
  %300 = vmatprep.subr.bf16.mxu0 0
  %301 = vmatpush1.bf16.msra.mxu0 0
  %302 = vmatprep.mubr.bf16.mxu0 0
  %303 = vmatmul.mubr.bf16.gmra.mrb[0].mxu0 %v190
  %v304 = vpop.f32.mrb[0].mxu0
  %v305 = vadd.f32 0.0, %v304
  %v306 = vpop.f32.mrb[0].mxu0
  %v307 = vpop.f32.mrb[0].mxu0
  %v308 = vpop.f32.mrb[0].mxu0
  %309 = vdwg.mxu0
  %311 = vrot.lane.b32.xlu0 %v257, 32
  %v312 = vpop.permute.xlu0 %311
  %v317 = vunpack.c.l.b16 %v170
  %v318 = vunpack.c.l.b16 %v171
  %v319 = vunpack.c.l.b16 %v172
  %v320 = vunpack.c.l.b16 %v173
  %v321 = vpack.c.b16 %v318, %v317
  %v322 = vpack.c.b16 %v320, %v319
  %v326 = vsel %vm188, %v312, 0
  %328 = vmatprep.subr.bf16.mxu0 0
  %329 = vmatpush1.bf16.msra.mxu0 %v321
  %330 = vmatprep.subr.bf16.mxu0 0
  %331 = vmatpush1.bf16.msra.mxu0 %v322
  %332 = vmatprep.subr.bf16.mxu0 0
  %333 = vmatpush1.bf16.msra.mxu0 0
  %334 = vmatprep.subr.bf16.mxu0 0
  %335 = vmatpush1.bf16.msra.mxu0 0
  %336 = vmatprep.subr.bf16.mxu0 0
  %337 = vmatpush1.bf16.msra.mxu0 0
  %338 = vmatprep.subr.bf16.mxu0 0
  %339 = vmatpush1.bf16.msra.mxu0 0
  %340 = vmatprep.subr.bf16.mxu0 0
  %341 = vmatpush1.bf16.msra.mxu0 0
  %342 = vmatprep.subr.bf16.mxu0 0
  %343 = vmatpush1.bf16.msra.mxu0 0
  %344 = vmatprep.subr.bf16.mxu0 0
  %345 = vmatpush1.bf16.msra.mxu0 0
  %346 = vmatprep.subr.bf16.mxu0 0
  %347 = vmatpush1.bf16.msra.mxu0 0
  %348 = vmatprep.subr.bf16.mxu0 0
  %349 = vmatpush1.bf16.msra.mxu0 0
  %350 = vmatprep.subr.bf16.mxu0 0
  %351 = vmatpush1.bf16.msra.mxu0 0
  %352 = vmatprep.subr.bf16.mxu0 0
  %353 = vmatpush1.bf16.msra.mxu0 0
  %354 = vmatprep.subr.bf16.mxu0 0
  %355 = vmatpush1.bf16.msra.mxu0 0
  %356 = vmatprep.subr.bf16.mxu0 0
  %357 = vmatpush1.bf16.msra.mxu0 0
  %358 = vmatprep.subr.bf16.mxu0 0
  %359 = vmatpush1.bf16.msra.mxu0 0
  %360 = vmatprep.mubr.bf16.mxu0 0
  %361 = vmatmul.mubr.bf16.gmra.mrb[0].mxu0 %v326
  %v362 = vpop.f32.mrb[0].mxu0
  %v363 = vadd.f32 %v305, %v362
  %v364 = vpop.f32.mrb[0].mxu0
  %v365 = vpop.f32.mrb[0].mxu0
  %v366 = vpop.f32.mrb[0].mxu0
  %367 = vdwg.mxu0
  %v369 = vlaneseq
  %v370 = vshrl.u32 %v369, 7
  %v371 = vsub.s32 0, %v370
  %v372 = vrot.slane %v174, %v371
  %v374 = vadd.f32 %v363, %v372
  %v375 = vxor.u32 %v374, 2147483648
  %v376 = vmul.f32 %v375, 1.442695
  %v377 = vpow.pop %v376
  %v378 = vadd.f32 %v377, 1.0
  %v379 = vrcp.pop %v378
  %v380 = vmul.f32 1.0, %v379
  %v381 = vtanh.pop %v374
  %v382 = vmul.f32 %v380, 0.0
  %384 = vrot.lane.b32.xlu0 %v381, 64
  %v385 = vpop.permute.xlu0 %384
  %v387 = vmul.f32 %v380, %v385
  %389 = vrot.lane.b32.xlu0 %v387, 32
  %v390 = vpop.permute.xlu0 %389
  %v392 = vadd.f32 %v382, %v390
  %v393 = vtanh.pop %v392
  %395 = vrot.lane.b32.xlu0 %v393, 64
  %v396 = vpop.permute.xlu0 %395
  %v398 = vmul.f32 %v380, %v396
  %v399 = vld [vmem:[#allocation2 + $0x8] sm:$0xff]
  %400 = vmatprep.subr.bf16.mxu0 0
  %401 = vmatpush1.bf16.msra.mxu0 %v184
  %402 = vmatprep.subr.bf16.mxu0 0
  %403 = vmatpush1.bf16.msra.mxu0 %v185
  %404 = vmatprep.subr.bf16.mxu0 0
  %405 = vmatpush1.bf16.msra.mxu0 0
  %406 = vmatprep.subr.bf16.mxu0 0
  %407 = vmatpush1.bf16.msra.mxu0 0
  %408 = vmatprep.subr.bf16.mxu0 0
  %409 = vmatpush1.bf16.msra.mxu0 0
  %410 = vmatprep.subr.bf16.mxu0 0
  %411 = vmatpush1.bf16.msra.mxu0 0
  %412 = vmatprep.subr.bf16.mxu0 0
  %413 = vmatpush1.bf16.msra.mxu0 0
  %414 = vmatprep.subr.bf16.mxu0 0
  %415 = vmatpush1.bf16.msra.mxu0 0
  %416 = vmatprep.subr.bf16.mxu0 0
  %417 = vmatpush1.bf16.msra.mxu0 0
  %418 = vmatprep.subr.bf16.mxu0 0
  %419 = vmatpush1.bf16.msra.mxu0 0
  %420 = vmatprep.subr.bf16.mxu0 0
  %421 = vmatpush1.bf16.msra.mxu0 0
  %422 = vmatprep.subr.bf16.mxu0 0
  %423 = vmatpush1.bf16.msra.mxu0 0
  %424 = vmatprep.subr.bf16.mxu0 0
  %425 = vmatpush1.bf16.msra.mxu0 0
  %426 = vmatprep.subr.bf16.mxu0 0
  %427 = vmatpush1.bf16.msra.mxu0 0
  %428 = vmatprep.subr.bf16.mxu0 0
  %429 = vmatpush1.bf16.msra.mxu0 0
  %430 = vmatprep.subr.bf16.mxu0 0
  %431 = vmatpush1.bf16.msra.mxu0 0
  %432 = vmatprep.mubr.bf16.mxu0 0
  %433 = vmatmul.mubr.bf16.gmra.mrb[0].mxu0 %v326
  %v434 = vpop.f32.mrb[0].mxu0
  %v435 = vadd.f32 0.0, %v434
  %v436 = vpop.f32.mrb[0].mxu0
  %v437 = vpop.f32.mrb[0].mxu0
  %v438 = vpop.f32.mrb[0].mxu0
  %439 = vdwg.mxu0
  %v440 = vadd.f32 %v399, %v435
  %v441 = vxor.u32 %v440, 2147483648
  %v442 = vmul.f32 %v441, 1.442695
  %v443 = vpow.pop %v442
  %v444 = vadd.f32 %v443, 1.0
  %v445 = vrcp.pop %v444
  %v446 = vmul.f32 1.0, %v445
  %v447 = vtanh.pop %v440
  %v448 = vmul.f32 %v446, %v250
  %450 = vrot.lane.b32.xlu0 %v447, 64
  %v451 = vpop.permute.xlu0 %450
  %v453 = vmul.f32 %v446, %v451
  %455 = vrot.lane.b32.xlu0 %v453, 32
  %v456 = vpop.permute.xlu0 %455
  %v458 = vadd.f32 %v448, %v456
  %v459 = vtanh.pop %v458
  %461 = vrot.lane.b32.xlu0 %v459, 64
  %v462 = vpop.permute.xlu0 %461
  %v464 = vmul.f32 %v446, %v462
  %v465 = vpack.c.bf16 %v464, %v464
  %v466 = vpack.c.bf16 %v398, %v398
  %468 = vrot.lane.b32.xlu0 %v466, 32
  %v469 = vpop.permute.xlu0 %468
  %v471 = vsel %vm188, %v469, 0
  %473 = vmatprep.subr.bf16.mxu0 0
  %474 = vmatpush1.bf16.msra.mxu0 %v266
  %475 = vmatprep.subr.bf16.mxu0 0
  %476 = vmatpush1.bf16.msra.mxu0 %v267
  %477 = vmatprep.subr.bf16.mxu0 0
  %478 = vmatpush1.bf16.msra.mxu0 0
  %479 = vmatprep.subr.bf16.mxu0 0
  %480 = vmatpush1.bf16.msra.mxu0 0
  %481 = vmatprep.subr.bf16.mxu0 0
  %482 = vmatpush1.bf16.msra.mxu0 0
  %483 = vmatprep.subr.bf16.mxu0 0
  %484 = vmatpush1.bf16.msra.mxu0 0
  %485 = vmatprep.subr.bf16.mxu0 0
  %486 = vmatpush1.bf16.msra.mxu0 0
  %487 = vmatprep.subr.bf16.mxu0 0
  %488 = vmatpush1.bf16.msra.mxu0 0
  %489 = vmatprep.subr.bf16.mxu0 0
  %490 = vmatpush1.bf16.msra.mxu0 0
  %491 = vmatprep.subr.bf16.mxu0 0
  %492 = vmatpush1.bf16.msra.mxu0 0
  %493 = vmatprep.subr.bf16.mxu0 0
  %494 = vmatpush1.bf16.msra.mxu0 0
  %495 = vmatprep.subr.bf16.mxu0 0
  %496 = vmatpush1.bf16.msra.mxu0 0
  %497 = vmatprep.subr.bf16.mxu0 0
  %498 = vmatpush1.bf16.msra.mxu0 0
  %499 = vmatprep.subr.bf16.mxu0 0
  %500 = vmatpush1.bf16.msra.mxu0 0
  %501 = vmatprep.subr.bf16.mxu0 0
  %502 = vmatpush1.bf16.msra.mxu0 0
  %503 = vmatprep.subr.bf16.mxu0 0
  %504 = vmatpush1.bf16.msra.mxu0 0
  %505 = vmatprep.mubr.bf16.mxu0 0
  %506 = vmatmul.mubr.bf16.gmra.mrb[0].mxu0 %v471
  %v507 = vpop.f32.mrb[0].mxu0
  %v508 = vadd.f32 0.0, %v507
  %v509 = vpop.f32.mrb[0].mxu0
  %v510 = vpop.f32.mrb[0].mxu0
  %v511 = vpop.f32.mrb[0].mxu0
  %512 = vdwg.mxu0
  %514 = vrot.lane.b32.xlu0 %v465, 32
  %v515 = vpop.permute.xlu0 %514
  %v517 = vsel %vm188, %v515, 0
  %519 = vmatprep.subr.bf16.mxu0 0
  %520 = vmatpush1.bf16.msra.mxu0 %v321
  %521 = vmatprep.subr.bf16.mxu0 0
  %522 = vmatpush1.bf16.msra.mxu0 %v322
  %523 = vmatprep.subr.bf16.mxu0 0
  %524 = vmatpush1.bf16.msra.mxu0 0
  %525 = vmatprep.subr.bf16.mxu0 0
  %526 = vmatpush1.bf16.msra.mxu0 0
  %527 = vmatprep.subr.bf16.mxu0 0
  %528 = vmatpush1.bf16.msra.mxu0 0
  %529 = vmatprep.subr.bf16.mxu0 0
  %530 = vmatpush1.bf16.msra.mxu0 0
  %531 = vmatprep.subr.bf16.mxu0 0
  %532 = vmatpush1.bf16.msra.mxu0 0
  %533 = vmatprep.subr.bf16.mxu0 0
  %534 = vmatpush1.bf16.msra.mxu0 0
  %535 = vmatprep.subr.bf16.mxu0 0
  %536 = vmatpush1.bf16.msra.mxu0 0
  %537 = vmatprep.subr.bf16.mxu0 0
  %538 = vmatpush1.bf16.msra.mxu0 0
  %539 = vmatprep.subr.bf16.mxu0 0
  %540 = vmatpush1.bf16.msra.mxu0 0
  %541 = vmatprep.subr.bf16.mxu0 0
  %542 = vmatpush1.bf16.msra.mxu0 0
  %543 = vmatprep.subr.bf16.mxu0 0
  %544 = vmatpush1.bf16.msra.mxu0 0
  %545 = vmatprep.subr.bf16.mxu0 0
  %546 = vmatpush1.bf16.msra.mxu0 0
  %547 = vmatprep.subr.bf16.mxu0 0
  %548 = vmatpush1.bf16.msra.mxu0 0
  %549 = vmatprep.subr.bf16.mxu0 0
  %550 = vmatpush1.bf16.msra.mxu0 0
  %551 = vmatprep.mubr.bf16.mxu0 0
  %552 = vmatmul.mubr.bf16.gmra.mrb[0].mxu0 %v517
  %v553 = vpop.f32.mrb[0].mxu0
  %v554 = vadd.f32 %v508, %v553
  %v555 = vpop.f32.mrb[0].mxu0
  %v556 = vpop.f32.mrb[0].mxu0
  %v557 = vpop.f32.mrb[0].mxu0
  %558 = vdwg.mxu0
  %v559 = vadd.f32 %v554, %v372
  %v560 = vxor.u32 %v559, 2147483648
  %v561 = vmul.f32 %v560, 1.442695
  %v562 = vpow.pop %v561
  %v563 = vadd.f32 %v562, 1.0
  %v564 = vrcp.pop %v563
  %v565 = vmul.f32 1.0, %v564
  %v566 = vtanh.pop %v559
  %v567 = vmul.f32 %v565, %v392
  %569 = vrot.lane.b32.xlu0 %v566, 64
  %v570 = vpop.permute.xlu0 %569
  %v572 = vmul.f32 %v565, %v570
  %574 = vrot.lane.b32.xlu0 %v572, 32
  %v575 = vpop.permute.xlu0 %574
  %v577 = vadd.f32 %v567, %v575
  %v578 = vtanh.pop %v577
  %580 = vrot.lane.b32.xlu0 %v578, 64
  %v581 = vpop.permute.xlu0 %580
  %v583 = vmul.f32 %v565, %v581
  %v584 = vld [vmem:[#allocation2 + $0x10] sm:$0xff]
  %585 = vmatprep.subr.bf16.mxu0 0
  %586 = vmatpush1.bf16.msra.mxu0 %v184
  %587 = vmatprep.subr.bf16.mxu0 0
  %588 = vmatpush1.bf16.msra.mxu0 %v185
  %589 = vmatprep.subr.bf16.mxu0 0
  %590 = vmatpush1.bf16.msra.mxu0 0
  %591 = vmatprep.subr.bf16.mxu0 0
  %592 = vmatpush1.bf16.msra.mxu0 0
  %593 = vmatprep.subr.bf16.mxu0 0
  %594 = vmatpush1.bf16.msra.mxu0 0
  %595 = vmatprep.subr.bf16.mxu0 0
  %596 = vmatpush1.bf16.msra.mxu0 0
  %597 = vmatprep.subr.bf16.mxu0 0
  %598 = vmatpush1.bf16.msra.mxu0 0
  %599 = vmatprep.subr.bf16.mxu0 0
  %600 = vmatpush1.bf16.msra.mxu0 0
  %601 = vmatprep.subr.bf16.mxu0 0
  %602 = vmatpush1.bf16.msra.mxu0 0
  %603 = vmatprep.subr.bf16.mxu0 0
  %604 = vmatpush1.bf16.msra.mxu0 0
  %605 = vmatprep.subr.bf16.mxu0 0
  %606 = vmatpush1.bf16.msra.mxu0 0
  %607 = vmatprep.subr.bf16.mxu0 0
  %608 = vmatpush1.bf16.msra.mxu0 0
  %609 = vmatprep.subr.bf16.mxu0 0
  %610 = vmatpush1.bf16.msra.mxu0 0
  %611 = vmatprep.subr.bf16.mxu0 0
  %612 = vmatpush1.bf16.msra.mxu0 0
  %613 = vmatprep.subr.bf16.mxu0 0
  %614 = vmatpush1.bf16.msra.mxu0 0
  %615 = vmatprep.subr.bf16.mxu0 0
  %616 = vmatpush1.bf16.msra.mxu0 0
  %617 = vmatprep.mubr.bf16.mxu0 0
  %618 = vmatmul.mubr.bf16.gmra.mrb[0].mxu0 %v517
  %v619 = vpop.f32.mrb[0].mxu0
  %v620 = vadd.f32 0.0, %v619
  %v621 = vpop.f32.mrb[0].mxu0
  %v622 = vpop.f32.mrb[0].mxu0
  %v623 = vpop.f32.mrb[0].mxu0
  %624 = vdwg.mxu0
  %v625 = vadd.f32 %v584, %v620
  %v626 = vxor.u32 %v625, 2147483648
  %v627 = vmul.f32 %v626, 1.442695
  %v628 = vpow.pop %v627
  %v629 = vadd.f32 %v628, 1.0
  %v630 = vrcp.pop %v629
  %v631 = vmul.f32 1.0, %v630
  %v632 = vtanh.pop %v625
  %v633 = vmul.f32 %v631, %v458
  %635 = vrot.lane.b32.xlu0 %v632, 64
  %v636 = vpop.permute.xlu0 %635
  %v638 = vmul.f32 %v631, %v636
  %640 = vrot.lane.b32.xlu0 %v638, 32
  %v641 = vpop.permute.xlu0 %640
  %v643 = vadd.f32 %v633, %v641
  %v644 = vtanh.pop %v643
  %646 = vrot.lane.b32.xlu0 %v644, 64
  %v647 = vpop.permute.xlu0 %646
  %v649 = vmul.f32 %v631, %v647
  %v650 = vpack.c.bf16 %v649, %v649
  %v651 = vpack.c.bf16 %v583, %v583
  %653 = vrot.lane.b32.xlu0 %v651, 32
  %v654 = vpop.permute.xlu0 %653
  %v656 = vsel %vm188, %v654, 0
  %658 = vmatprep.subr.bf16.mxu0 0
  %659 = vmatpush1.bf16.msra.mxu0 %v266
  %660 = vmatprep.subr.bf16.mxu0 0
  %661 = vmatpush1.bf16.msra.mxu0 %v267
  %662 = vmatprep.subr.bf16.mxu0 0
  %663 = vmatpush1.bf16.msra.mxu0 0
  %664 = vmatprep.subr.bf16.mxu0 0
  %665 = vmatpush1.bf16.msra.mxu0 0
  %666 = vmatprep.subr.bf16.mxu0 0
  %667 = vmatpush1.bf16.msra.mxu0 0
  %668 = vmatprep.subr.bf16.mxu0 0
  %669 = vmatpush1.bf16.msra.mxu0 0
  %670 = vmatprep.subr.bf16.mxu0 0
  %671 = vmatpush1.bf16.msra.mxu0 0
  %672 = vmatprep.subr.bf16.mxu0 0
  %673 = vmatpush1.bf16.msra.mxu0 0
  %674 = vmatprep.subr.bf16.mxu0 0
  %675 = vmatpush1.bf16.msra.mxu0 0
  %676 = vmatprep.subr.bf16.mxu0 0
  %677 = vmatpush1.bf16.msra.mxu0 0
  %678 = vmatprep.subr.bf16.mxu0 0
  %679 = vmatpush1.bf16.msra.mxu0 0
  %680 = vmatprep.subr.bf16.mxu0 0
  %681 = vmatpush1.bf16.msra.mxu0 0
  %682 = vmatprep.subr.bf16.mxu0 0
  %683 = vmatpush1.bf16.msra.mxu0 0
  %684 = vmatprep.subr.bf16.mxu0 0
  %685 = vmatpush1.bf16.msra.mxu0 0
  %686 = vmatprep.subr.bf16.mxu0 0
  %687 = vmatpush1.bf16.msra.mxu0 0
  %688 = vmatprep.subr.bf16.mxu0 0
  %689 = vmatpush1.bf16.msra.mxu0 0
  %690 = vmatprep.mubr.bf16.mxu0 0
  %691 = vmatmul.mubr.bf16.gmra.mrb[0].mxu0 %v656
  %v692 = vpop.f32.mrb[0].mxu0
  %v693 = vadd.f32 0.0, %v692
  %v694 = vpop.f32.mrb[0].mxu0
  %v695 = vpop.f32.mrb[0].mxu0
  %v696 = vpop.f32.mrb[0].mxu0
  %697 = vdwg.mxu0
  %699 = vrot.lane.b32.xlu0 %v650, 32
  %v700 = vpop.permute.xlu0 %699
  %v702 = vsel %vm188, %v700, 0
  %704 = vmatprep.subr.bf16.mxu0 0
  %705 = vmatpush1.bf16.msra.mxu0 %v321
  %706 = vmatprep.subr.bf16.mxu0 0
  %707 = vmatpush1.bf16.msra.mxu0 %v322
  %708 = vmatprep.subr.bf16.mxu0 0
  %709 = vmatpush1.bf16.msra.mxu0 0
  %710 = vmatprep.subr.bf16.mxu0 0
  %711 = vmatpush1.bf16.msra.mxu0 0
  %712 = vmatprep.subr.bf16.mxu0 0
  %713 = vmatpush1.bf16.msra.mxu0 0
  %714 = vmatprep.subr.bf16.mxu0 0
  %715 = vmatpush1.bf16.msra.mxu0 0
  %716 = vmatprep.subr.bf16.mxu0 0
  %717 = vmatpush1.bf16.msra.mxu0 0
  %718 = vmatprep.subr.bf16.mxu0 0
  %719 = vmatpush1.bf16.msra.mxu0 0
  %720 = vmatprep.subr.bf16.mxu0 0
  %721 = vmatpush1.bf16.msra.mxu0 0
  %722 = vmatprep.subr.bf16.mxu0 0
  %723 = vmatpush1.bf16.msra.mxu0 0
  %724 = vmatprep.subr.bf16.mxu0 0
  %725 = vmatpush1.bf16.msra.mxu0 0
  %726 = vmatprep.subr.bf16.mxu0 0
  %727 = vmatpush1.bf16.msra.mxu0 0
  %728 = vmatprep.subr.bf16.mxu0 0
  %729 = vmatpush1.bf16.msra.mxu0 0
  %730 = vmatprep.subr.bf16.mxu0 0
  %731 = vmatpush1.bf16.msra.mxu0 0
  %732 = vmatprep.subr.bf16.mxu0 0
  %733 = vmatpush1.bf16.msra.mxu0 0
  %734 = vmatprep.subr.bf16.mxu0 0
  %735 = vmatpush1.bf16.msra.mxu0 0
  %736 = vmatprep.mubr.bf16.mxu0 0
  %737 = vmatmul.mubr.bf16.gmra.mrb[0].mxu0 %v702
  %v738 = vpop.f32.mrb[0].mxu0
  %v739 = vadd.f32 %v693, %v738
  %v740 = vpop.f32.mrb[0].mxu0
  %v741 = vpop.f32.mrb[0].mxu0
  %v742 = vpop.f32.mrb[0].mxu0
  %743 = vdwg.mxu0
  %v744 = vadd.f32 %v739, %v372
  %v745 = vxor.u32 %v744, 2147483648
  %v746 = vmul.f32 %v745, 1.442695
  %v747 = vpow.pop %v746
  %v748 = vadd.f32 %v747, 1.0
  %v749 = vrcp.pop %v748
  %v750 = vmul.f32 1.0, %v749
  %v751 = vtanh.pop %v744
  %v752 = vmul.f32 %v750, %v577
  %754 = vrot.lane.b32.xlu0 %v751, 64
  %v755 = vpop.permute.xlu0 %754
  %v757 = vmul.f32 %v750, %v755
  %759 = vrot.lane.b32.xlu0 %v757, 32
  %v760 = vpop.permute.xlu0 %759
  %v762 = vadd.f32 %v752, %v760
  %v763 = vtanh.pop %v762
  %765 = vrot.lane.b32.xlu0 %v763, 64
  %v766 = vpop.permute.xlu0 %765
  %v768 = vmul.f32 %v750, %v766
  %v769 = vld [vmem:[#allocation2 + $0x18] sm:$0xff]
  %770 = vmatprep.subr.bf16.mxu0 0
  %771 = vmatpush1.bf16.msra.mxu0 %v184
  %772 = vmatprep.subr.bf16.mxu0 0
  %773 = vmatpush1.bf16.msra.mxu0 %v185
  %774 = vmatprep.subr.bf16.mxu0 0
  %775 = vmatpush1.bf16.msra.mxu0 0
  %776 = vmatprep.subr.bf16.mxu0 0
  %777 = vmatpush1.bf16.msra.mxu0 0
  %778 = vmatprep.subr.bf16.mxu0 0
  %779 = vmatpush1.bf16.msra.mxu0 0
  %780 = vmatprep.subr.bf16.mxu0 0
  %781 = vmatpush1.bf16.msra.mxu0 0
  %782 = vmatprep.subr.bf16.mxu0 0
  %783 = vmatpush1.bf16.msra.mxu0 0
  %784 = vmatprep.subr.bf16.mxu0 0
  %785 = vmatpush1.bf16.msra.mxu0 0
  %786 = vmatprep.subr.bf16.mxu0 0
  %787 = vmatpush1.bf16.msra.mxu0 0
  %788 = vmatprep.subr.bf16.mxu0 0
  %789 = vmatpush1.bf16.msra.mxu0 0
  %790 = vmatprep.subr.bf16.mxu0 0
  %791 = vmatpush1.bf16.msra.mxu0 0
  %792 = vmatprep.subr.bf16.mxu0 0
  %793 = vmatpush1.bf16.msra.mxu0 0
  %794 = vmatprep.subr.bf16.mxu0 0
  %795 = vmatpush1.bf16.msra.mxu0 0
  %796 = vmatprep.subr.bf16.mxu0 0
  %797 = vmatpush1.bf16.msra.mxu0 0
  %798 = vmatprep.subr.bf16.mxu0 0
  %799 = vmatpush1.bf16.msra.mxu0 0
  %800 = vmatprep.subr.bf16.mxu0 0
  %801 = vmatpush1.bf16.msra.mxu0 0
  %802 = vmatprep.mubr.bf16.mxu0 0
  %803 = vmatmul.mubr.bf16.gmra.mrb[0].mxu0 %v702
  %v804 = vpop.f32.mrb[0].mxu0
  %v805 = vadd.f32 0.0, %v804
  %v806 = vpop.f32.mrb[0].mxu0
  %v807 = vpop.f32.mrb[0].mxu0
  %v808 = vpop.f32.mrb[0].mxu0
  %809 = vdwg.mxu0
  %v810 = vadd.f32 %v769, %v805
  %v811 = vxor.u32 %v810, 2147483648
  %v812 = vmul.f32 %v811, 1.442695
  %v813 = vpow.pop %v812
  %v814 = vadd.f32 %v813, 1.0
  %v815 = vrcp.pop %v814
  %v816 = vmul.f32 1.0, %v815
  %v817 = vtanh.pop %v810
  %v818 = vmul.f32 %v816, %v643
  %820 = vrot.lane.b32.xlu0 %v817, 64
  %v821 = vpop.permute.xlu0 %820
  %v823 = vmul.f32 %v816, %v821
  %825 = vrot.lane.b32.xlu0 %v823, 32
  %v826 = vpop.permute.xlu0 %825
  %v828 = vadd.f32 %v818, %v826
  %v829 = vtanh.pop %v828
  %831 = vrot.lane.b32.xlu0 %v829, 64
  %v832 = vpop.permute.xlu0 %831
  %v834 = vmul.f32 %v816, %v832
  %v835 = vpack.c.bf16 %v834, %v834
  %v836 = vpack.c.bf16 %v768, %v768
  %838 = vrot.lane.b32.xlu0 %v836, 32
  %v839 = vpop.permute.xlu0 %838
  %v841 = vsel %vm188, %v839, 0
  %843 = vmatprep.subr.bf16.mxu0 0
  %844 = vmatpush1.bf16.msra.mxu0 %v266
  %845 = vmatprep.subr.bf16.mxu0 0
  %846 = vmatpush1.bf16.msra.mxu0 %v267
  %847 = vmatprep.subr.bf16.mxu0 0
  %848 = vmatpush1.bf16.msra.mxu0 0
  %849 = vmatprep.subr.bf16.mxu0 0
  %850 = vmatpush1.bf16.msra.mxu0 0
  %851 = vmatprep.subr.bf16.mxu0 0
  %852 = vmatpush1.bf16.msra.mxu0 0
  %853 = vmatprep.subr.bf16.mxu0 0
  %854 = vmatpush1.bf16.msra.mxu0 0
  %855 = vmatprep.subr.bf16.mxu0 0
  %856 = vmatpush1.bf16.msra.mxu0 0
  %857 = vmatprep.subr.bf16.mxu0 0
  %858 = vmatpush1.bf16.msra.mxu0 0
  %859 = vmatprep.subr.bf16.mxu0 0
  %860 = vmatpush1.bf16.msra.mxu0 0
  %861 = vmatprep.subr.bf16.mxu0 0
  %862 = vmatpush1.bf16.msra.mxu0 0
  %863 = vmatprep.subr.bf16.mxu0 0
  %864 = vmatpush1.bf16.msra.mxu0 0
  %865 = vmatprep.subr.bf16.mxu0 0
  %866 = vmatpush1.bf16.msra.mxu0 0
  %867 = vmatprep.subr.bf16.mxu0 0
  %868 = vmatpush1.bf16.msra.mxu0 0
  %869 = vmatprep.subr.bf16.mxu0 0
  %870 = vmatpush1.bf16.msra.mxu0 0
  %871 = vmatprep.subr.bf16.mxu0 0
  %872 = vmatpush1.bf16.msra.mxu0 0
  %873 = vmatprep.subr.bf16.mxu0 0
  %874 = vmatpush1.bf16.msra.mxu0 0
  %875 = vmatprep.mubr.bf16.mxu0 0
  %876 = vmatmul.mubr.bf16.gmra.mrb[0].mxu0 %v841
  %v877 = vpop.f32.mrb[0].mxu0
  %v878 = vadd.f32 0.0, %v877
  %v879 = vpop.f32.mrb[0].mxu0
  %v880 = vpop.f32.mrb[0].mxu0
  %v881 = vpop.f32.mrb[0].mxu0
  %882 = vdwg.mxu0
  %884 = vrot.lane.b32.xlu0 %v835, 32
  %v885 = vpop.permute.xlu0 %884
  %v887 = vsel %vm188, %v885, 0
  %889 = vmatprep.subr.bf16.mxu0 0
  %890 = vmatpush1.bf16.msra.mxu0 %v321
  %891 = vmatprep.subr.bf16.mxu0 0
  %892 = vmatpush1.bf16.msra.mxu0 %v322
  %893 = vmatprep.subr.bf16.mxu0 0
  %894 = vmatpush1.bf16.msra.mxu0 0
  %895 = vmatprep.subr.bf16.mxu0 0
  %896 = vmatpush1.bf16.msra.mxu0 0
  %897 = vmatprep.subr.bf16.mxu0 0
  %898 = vmatpush1.bf16.msra.mxu0 0
  %899 = vmatprep.subr.bf16.mxu0 0
  %900 = vmatpush1.bf16.msra.mxu0 0
  %901 = vmatprep.subr.bf16.mxu0 0
  %902 = vmatpush1.bf16.msra.mxu0 0
  %903 = vmatprep.subr.bf16.mxu0 0
  %904 = vmatpush1.bf16.msra.mxu0 0
  %905 = vmatprep.subr.bf16.mxu0 0
  %906 = vmatpush1.bf16.msra.mxu0 0
  %907 = vmatprep.subr.bf16.mxu0 0
  %908 = vmatpush1.bf16.msra.mxu0 0
  %909 = vmatprep.subr.bf16.mxu0 0
  %910 = vmatpush1.bf16.msra.mxu0 0
  %911 = vmatprep.subr.bf16.mxu0 0
  %912 = vmatpush1.bf16.msra.mxu0 0
  %913 = vmatprep.subr.bf16.mxu0 0
  %914 = vmatpush1.bf16.msra.mxu0 0
  %915 = vmatprep.subr.bf16.mxu0 0
  %916 = vmatpush1.bf16.msra.mxu0 0
  %917 = vmatprep.subr.bf16.mxu0 0
  %918 = vmatpush1.bf16.msra.mxu0 0
  %919 = vmatprep.subr.bf16.mxu0 0
  %920 = vmatpush1.bf16.msra.mxu0 0
  %921 = vmatprep.mubr.bf16.mxu0 0
  %922 = vmatmul.mubr.bf16.gmra.mrb[0].mxu0 %v887
  %v923 = vpop.f32.mrb[0].mxu0
  %v924 = vadd.f32 %v878, %v923
  %v925 = vpop.f32.mrb[0].mxu0
  %v926 = vpop.f32.mrb[0].mxu0
  %v927 = vpop.f32.mrb[0].mxu0
  %928 = vdwg.mxu0
  %v929 = vadd.f32 %v924, %v372
  %v930 = vxor.u32 %v929, 2147483648
  %v931 = vmul.f32 %v930, 1.442695
  %v932 = vpow.pop %v931
  %v933 = vadd.f32 %v932, 1.0
  %v934 = vrcp.pop %v933
  %v935 = vmul.f32 1.0, %v934
  %v936 = vtanh.pop %v929
  %v937 = vmul.f32 %v935, %v762
  %939 = vrot.lane.b32.xlu0 %v936, 64
  %v940 = vpop.permute.xlu0 %939
  %v942 = vmul.f32 %v935, %v940
  %944 = vrot.lane.b32.xlu0 %v942, 32
  %v945 = vpop.permute.xlu0 %944
  %v947 = vadd.f32 %v937, %v945
  %v948 = vtanh.pop %v947
  %950 = vrot.lane.b32.xlu0 %v948, 64
  %v951 = vpop.permute.xlu0 %950
  %v953 = vmul.f32 %v935, %v951
  %v954 = vld [vmem:[#allocation2 + $0x20] sm:$0xff]
  %955 = vmatprep.subr.bf16.mxu0 0
  %956 = vmatpush1.bf16.msra.mxu0 %v184
  %957 = vmatprep.subr.bf16.mxu0 0
  %958 = vmatpush1.bf16.msra.mxu0 %v185
  %959 = vmatprep.subr.bf16.mxu0 0
  %960 = vmatpush1.bf16.msra.mxu0 0
  %961 = vmatprep.subr.bf16.mxu0 0
  %962 = vmatpush1.bf16.msra.mxu0 0
  %963 = vmatprep.subr.bf16.mxu0 0
  %964 = vmatpush1.bf16.msra.mxu0 0
  %965 = vmatprep.subr.bf16.mxu0 0
  %966 = vmatpush1.bf16.msra.mxu0 0
  %967 = vmatprep.subr.bf16.mxu0 0
  %968 = vmatpush1.bf16.msra.mxu0 0
  %969 = vmatprep.subr.bf16.mxu0 0
  %970 = vmatpush1.bf16.msra.mxu0 0
  %971 = vmatprep.subr.bf16.mxu0 0
  %972 = vmatpush1.bf16.msra.mxu0 0
  %973 = vmatprep.subr.bf16.mxu0 0
  %974 = vmatpush1.bf16.msra.mxu0 0
  %975 = vmatprep.subr.bf16.mxu0 0
  %976 = vmatpush1.bf16.msra.mxu0 0
  %977 = vmatprep.subr.bf16.mxu0 0
  %978 = vmatpush1.bf16.msra.mxu0 0
  %979 = vmatprep.subr.bf16.mxu0 0
  %980 = vmatpush1.bf16.msra.mxu0 0
  %981 = vmatprep.subr.bf16.mxu0 0
  %982 = vmatpush1.bf16.msra.mxu0 0
  %983 = vmatprep.subr.bf16.mxu0 0
  %984 = vmatpush1.bf16.msra.mxu0 0
  %985 = vmatprep.subr.bf16.mxu0 0
  %986 = vmatpush1.bf16.msra.mxu0 0
  %987 = vmatprep.mubr.bf16.mxu0 0
  %988 = vmatmul.mubr.bf16.gmra.mrb[0].mxu0 %v887
  %v989 = vpop.f32.mrb[0].mxu0
  %v990 = vadd.f32 0.0, %v989
  %v991 = vpop.f32.mrb[0].mxu0
  %v992 = vpop.f32.mrb[0].mxu0
  %v993 = vpop.f32.mrb[0].mxu0
  %994 = vdwg.mxu0
  %v995 = vadd.f32 %v954, %v990
  %v996 = vxor.u32 %v995, 2147483648
  %v997 = vmul.f32 %v996, 1.442695
  %v998 = vpow.pop %v997
  %v999 = vadd.f32 %v998, 1.0
  %v1000 = vrcp.pop %v999
  %v1001 = vmul.f32 1.0, %v1000
  %v1002 = vtanh.pop %v995
  %v1003 = vmul.f32 %v1001, %v828
  %1005 = vrot.lane.b32.xlu0 %v1002, 64
  %v1006 = vpop.permute.xlu0 %1005
  %v1008 = vmul.f32 %v1001, %v1006
  %1010 = vrot.lane.b32.xlu0 %v1008, 32
  %v1011 = vpop.permute.xlu0 %1010
  %v1013 = vadd.f32 %v1003, %v1011
  %v1014 = vtanh.pop %v1013
  %1016 = vrot.lane.b32.xlu0 %v1014, 64
  %v1017 = vpop.permute.xlu0 %1016
  %v1019 = vmul.f32 %v1001, %v1017
  %v1020 = vpack.c.bf16 %v1019, %v1019
  %v1021 = vpack.c.bf16 %v953, %v953
  %1023 = vrot.lane.b32.xlu0 %v1021, 32
  %v1024 = vpop.permute.xlu0 %1023
  %v1026 = vsel %vm188, %v1024, 0
  %1028 = vmatprep.subr.bf16.mxu0 0
  %1029 = vmatpush1.bf16.msra.mxu0 %v266
  %1030 = vmatprep.subr.bf16.mxu0 0
  %1031 = vmatpush1.bf16.msra.mxu0 %v267
  %1032 = vmatprep.subr.bf16.mxu0 0
  %1033 = vmatpush1.bf16.msra.mxu0 0
  %1034 = vmatprep.subr.bf16.mxu0 0
  %1035 = vmatpush1.bf16.msra.mxu0 0
  %1036 = vmatprep.subr.bf16.mxu0 0
  %1037 = vmatpush1.bf16.msra.mxu0 0
  %1038 = vmatprep.subr.bf16.mxu0 0
  %1039 = vmatpush1.bf16.msra.mxu0 0
  %1040 = vmatprep.subr.bf16.mxu0 0
  %1041 = vmatpush1.bf16.msra.mxu0 0
  %1042 = vmatprep.subr.bf16.mxu0 0
  %1043 = vmatpush1.bf16.msra.mxu0 0
  %1044 = vmatprep.subr.bf16.mxu0 0
  %1045 = vmatpush1.bf16.msra.mxu0 0
  %1046 = vmatprep.subr.bf16.mxu0 0
  %1047 = vmatpush1.bf16.msra.mxu0 0
  %1048 = vmatprep.subr.bf16.mxu0 0
  %1049 = vmatpush1.bf16.msra.mxu0 0
  %1050 = vmatprep.subr.bf16.mxu0 0
  %1051 = vmatpush1.bf16.msra.mxu0 0
  %1052 = vmatprep.subr.bf16.mxu0 0
  %1053 = vmatpush1.bf16.msra.mxu0 0
  %1054 = vmatprep.subr.bf16.mxu0 0
  %1055 = vmatpush1.bf16.msra.mxu0 0
  %1056 = vmatprep.subr.bf16.mxu0 0
  %1057 = vmatpush1.bf16.msra.mxu0 0
  %1058 = vmatprep.subr.bf16.mxu0 0
  %1059 = vmatpush1.bf16.msra.mxu0 0
  %1060 = vmatprep.mubr.bf16.mxu0 0
  %1061 = vmatmul.mubr.bf16.gmra.mrb[0].mxu0 %v1026
  %v1062 = vpop.f32.mrb[0].mxu0
  %v1063 = vadd.f32 0.0, %v1062
  %v1064 = vpop.f32.mrb[0].mxu0
  %v1065 = vpop.f32.mrb[0].mxu0
  %v1066 = vpop.f32.mrb[0].mxu0
  %1067 = vdwg.mxu0
  %1069 = vrot.lane.b32.xlu0 %v1020, 32
  %v1070 = vpop.permute.xlu0 %1069
  %v1072 = vsel %vm188, %v1070, 0
  %1074 = vmatprep.subr.bf16.mxu0 0
  %1075 = vmatpush1.bf16.msra.mxu0 %v321
  %1076 = vmatprep.subr.bf16.mxu0 0
  %1077 = vmatpush1.bf16.msra.mxu0 %v322
  %1078 = vmatprep.subr.bf16.mxu0 0
  %1079 = vmatpush1.bf16.msra.mxu0 0
  %1080 = vmatprep.subr.bf16.mxu0 0
  %1081 = vmatpush1.bf16.msra.mxu0 0
  %1082 = vmatprep.subr.bf16.mxu0 0
  %1083 = vmatpush1.bf16.msra.mxu0 0
  %1084 = vmatprep.subr.bf16.mxu0 0
  %1085 = vmatpush1.bf16.msra.mxu0 0
  %1086 = vmatprep.subr.bf16.mxu0 0
  %1087 = vmatpush1.bf16.msra.mxu0 0
  %1088 = vmatprep.subr.bf16.mxu0 0
  %1089 = vmatpush1.bf16.msra.mxu0 0
  %1090 = vmatprep.subr.bf16.mxu0 0
  %1091 = vmatpush1.bf16.msra.mxu0 0
  %1092 = vmatprep.subr.bf16.mxu0 0
  %1093 = vmatpush1.bf16.msra.mxu0 0
  %1094 = vmatprep.subr.bf16.mxu0 0
  %1095 = vmatpush1.bf16.msra.mxu0 0
  %1096 = vmatprep.subr.bf16.mxu0 0
  %1097 = vmatpush1.bf16.msra.mxu0 0
  %1098 = vmatprep.subr.bf16.mxu0 0
  %1099 = vmatpush1.bf16.msra.mxu0 0
  %1100 = vmatprep.subr.bf16.mxu0 0
  %1101 = vmatpush1.bf16.msra.mxu0 0
  %1102 = vmatprep.subr.bf16.mxu0 0
  %1103 = vmatpush1.bf16.msra.mxu0 0
  %1104 = vmatprep.subr.bf16.mxu0 0
  %1105 = vmatpush1.bf16.msra.mxu0 0
  %1106 = vmatprep.mubr.bf16.mxu0 0
  %1107 = vmatmul.mubr.bf16.gmra.mrb[0].mxu0 %v1072
  %v1108 = vpop.f32.mrb[0].mxu0
  %v1109 = vadd.f32 %v1063, %v1108
  %v1110 = vpop.f32.mrb[0].mxu0
  %v1111 = vpop.f32.mrb[0].mxu0
  %v1112 = vpop.f32.mrb[0].mxu0
  %1113 = vdwg.mxu0
  %v1114 = vadd.f32 %v1109, %v372
  %v1115 = vxor.u32 %v1114, 2147483648
  %v1116 = vmul.f32 %v1115, 1.442695
  %v1117 = vpow.pop %v1116
  %v1118 = vadd.f32 %v1117, 1.0
  %v1119 = vrcp.pop %v1118
  %v1120 = vmul.f32 1.0, %v1119
  %v1121 = vtanh.pop %v1114
  %v1122 = vmul.f32 %v1120, %v947
  %1124 = vrot.lane.b32.xlu0 %v1121, 64
  %v1125 = vpop.permute.xlu0 %1124
  %v1127 = vmul.f32 %v1120, %v1125
  %1129 = vrot.lane.b32.xlu0 %v1127, 32
  %v1130 = vpop.permute.xlu0 %1129
  %v1132 = vadd.f32 %v1122, %v1130
  %v1133 = vtanh.pop %v1132
  %1135 = vrot.lane.b32.xlu0 %v1133, 64
  %v1136 = vpop.permute.xlu0 %1135
  %v1138 = vmul.f32 %v1120, %v1136
  %v1139 = vld [vmem:[#allocation2 + $0x28] sm:$0xff]
  %1140 = vmatprep.subr.bf16.mxu0 0
  %1141 = vmatpush1.bf16.msra.mxu0 %v184
  %1142 = vmatprep.subr.bf16.mxu0 0
  %1143 = vmatpush1.bf16.msra.mxu0 %v185
  %1144 = vmatprep.subr.bf16.mxu0 0
  %1145 = vmatpush1.bf16.msra.mxu0 0
  %1146 = vmatprep.subr.bf16.mxu0 0
  %1147 = vmatpush1.bf16.msra.mxu0 0
  %1148 = vmatprep.subr.bf16.mxu0 0
  %1149 = vmatpush1.bf16.msra.mxu0 0
  %1150 = vmatprep.subr.bf16.mxu0 0
  %1151 = vmatpush1.bf16.msra.mxu0 0
  %1152 = vmatprep.subr.bf16.mxu0 0
  %1153 = vmatpush1.bf16.msra.mxu0 0
  %1154 = vmatprep.subr.bf16.mxu0 0
  %1155 = vmatpush1.bf16.msra.mxu0 0
  %1156 = vmatprep.subr.bf16.mxu0 0
  %1157 = vmatpush1.bf16.msra.mxu0 0
  %1158 = vmatprep.subr.bf16.mxu0 0
  %1159 = vmatpush1.bf16.msra.mxu0 0
  %1160 = vmatprep.subr.bf16.mxu0 0
  %1161 = vmatpush1.bf16.msra.mxu0 0
  %1162 = vmatprep.subr.bf16.mxu0 0
  %1163 = vmatpush1.bf16.msra.mxu0 0
  %1164 = vmatprep.subr.bf16.mxu0 0
  %1165 = vmatpush1.bf16.msra.mxu0 0
  %1166 = vmatprep.subr.bf16.mxu0 0
  %1167 = vmatpush1.bf16.msra.mxu0 0
  %1168 = vmatprep.subr.bf16.mxu0 0
  %1169 = vmatpush1.bf16.msra.mxu0 0
  %1170 = vmatprep.subr.bf16.mxu0 0
  %1171 = vmatpush1.bf16.msra.mxu0 0
  %1172 = vmatprep.mubr.bf16.mxu0 0
  %1173 = vmatmul.mubr.bf16.gmra.mrb[0].mxu0 %v1072
  %v1174 = vpop.f32.mrb[0].mxu0
  %v1175 = vadd.f32 0.0, %v1174
  %v1176 = vpop.f32.mrb[0].mxu0
  %v1177 = vpop.f32.mrb[0].mxu0
  %v1178 = vpop.f32.mrb[0].mxu0
  %1179 = vdwg.mxu0
  %v1180 = vadd.f32 %v1139, %v1175
  %v1181 = vxor.u32 %v1180, 2147483648
  %v1182 = vmul.f32 %v1181, 1.442695
  %v1183 = vpow.pop %v1182
  %v1184 = vadd.f32 %v1183, 1.0
  %v1185 = vrcp.pop %v1184
  %v1186 = vmul.f32 1.0, %v1185
  %v1187 = vtanh.pop %v1180
  %v1188 = vmul.f32 %v1186, %v1013
  %1190 = vrot.lane.b32.xlu0 %v1187, 64
  %v1191 = vpop.permute.xlu0 %1190
  %v1193 = vmul.f32 %v1186, %v1191
  %1195 = vrot.lane.b32.xlu0 %v1193, 32
  %v1196 = vpop.permute.xlu0 %1195
  %v1198 = vadd.f32 %v1188, %v1196
  %v1199 = vtanh.pop %v1198
  %1201 = vrot.lane.b32.xlu0 %v1199, 64
  %v1202 = vpop.permute.xlu0 %1201
  %v1204 = vmul.f32 %v1186, %v1202
  %v1205 = vpack.c.bf16 %v1204, %v1204
  %v1206 = vpack.c.bf16 %v1138, %v1138
  %1208 = vrot.lane.b32.xlu0 %v1206, 32
  %v1209 = vpop.permute.xlu0 %1208
  %v1211 = vsel %vm188, %v1209, 0
  %1213 = vmatprep.subr.bf16.mxu0 0
  %1214 = vmatpush1.bf16.msra.mxu0 %v266
  %1215 = vmatprep.subr.bf16.mxu0 0
  %1216 = vmatpush1.bf16.msra.mxu0 %v267
  %1217 = vmatprep.subr.bf16.mxu0 0
  %1218 = vmatpush1.bf16.msra.mxu0 0
  %1219 = vmatprep.subr.bf16.mxu0 0
  %1220 = vmatpush1.bf16.msra.mxu0 0
  %1221 = vmatprep.subr.bf16.mxu0 0
  %1222 = vmatpush1.bf16.msra.mxu0 0
  %1223 = vmatprep.subr.bf16.mxu0 0
  %1224 = vmatpush1.bf16.msra.mxu0 0
  %1225 = vmatprep.subr.bf16.mxu0 0
  %1226 = vmatpush1.bf16.msra.mxu0 0
  %1227 = vmatprep.subr.bf16.mxu0 0
  %1228 = vmatpush1.bf16.msra.mxu0 0
  %1229 = vmatprep.subr.bf16.mxu0 0
  %1230 = vmatpush1.bf16.msra.mxu0 0
  %1231 = vmatprep.subr.bf16.mxu0 0
  %1232 = vmatpush1.bf16.msra.mxu0 0
  %1233 = vmatprep.subr.bf16.mxu0 0
  %1234 = vmatpush1.bf16.msra.mxu0 0
  %1235 = vmatprep.subr.bf16.mxu0 0
  %1236 = vmatpush1.bf16.msra.mxu0 0
  %1237 = vmatprep.subr.bf16.mxu0 0
  %1238 = vmatpush1.bf16.msra.mxu0 0
  %1239 = vmatprep.subr.bf16.mxu0 0
  %1240 = vmatpush1.bf16.msra.mxu0 0
  %1241 = vmatprep.subr.bf16.mxu0 0
  %1242 = vmatpush1.bf16.msra.mxu0 0
  %1243 = vmatprep.subr.bf16.mxu0 0
  %1244 = vmatpush1.bf16.msra.mxu0 0
  %1245 = vmatprep.mubr.bf16.mxu0 0
  %1246 = vmatmul.mubr.bf16.gmra.mrb[0].mxu0 %v1211
  %v1247 = vpop.f32.mrb[0].mxu0
  %v1248 = vadd.f32 0.0, %v1247
  %v1249 = vpop.f32.mrb[0].mxu0
  %v1250 = vpop.f32.mrb[0].mxu0
  %v1251 = vpop.f32.mrb[0].mxu0
  %1252 = vdwg.mxu0
  %1254 = vrot.lane.b32.xlu0 %v1205, 32
  %v1255 = vpop.permute.xlu0 %1254
  %v1257 = vsel %vm188, %v1255, 0
  %1259 = vmatprep.subr.bf16.mxu0 0
  %1260 = vmatpush1.bf16.msra.mxu0 %v321
  %1261 = vmatprep.subr.bf16.mxu0 0
  %1262 = vmatpush1.bf16.msra.mxu0 %v322
  %1263 = vmatprep.subr.bf16.mxu0 0
  %1264 = vmatpush1.bf16.msra.mxu0 0
  %1265 = vmatprep.subr.bf16.mxu0 0
  %1266 = vmatpush1.bf16.msra.mxu0 0
  %1267 = vmatprep.subr.bf16.mxu0 0
  %1268 = vmatpush1.bf16.msra.mxu0 0
  %1269 = vmatprep.subr.bf16.mxu0 0
  %1270 = vmatpush1.bf16.msra.mxu0 0
  %1271 = vmatprep.subr.bf16.mxu0 0
  %1272 = vmatpush1.bf16.msra.mxu0 0
  %1273 = vmatprep.subr.bf16.mxu0 0
  %1274 = vmatpush1.bf16.msra.mxu0 0
  %1275 = vmatprep.subr.bf16.mxu0 0
  %1276 = vmatpush1.bf16.msra.mxu0 0
  %1277 = vmatprep.subr.bf16.mxu0 0
  %1278 = vmatpush1.bf16.msra.mxu0 0
  %1279 = vmatprep.subr.bf16.mxu0 0
  %1280 = vmatpush1.bf16.msra.mxu0 0
  %1281 = vmatprep.subr.bf16.mxu0 0
  %1282 = vmatpush1.bf16.msra.mxu0 0
  %1283 = vmatprep.subr.bf16.mxu0 0
  %1284 = vmatpush1.bf16.msra.mxu0 0
  %1285 = vmatprep.subr.bf16.mxu0 0
  %1286 = vmatpush1.bf16.msra.mxu0 0
  %1287 = vmatprep.subr.bf16.mxu0 0
  %1288 = vmatpush1.bf16.msra.mxu0 0
  %1289 = vmatprep.subr.bf16.mxu0 0
  %1290 = vmatpush1.bf16.msra.mxu0 0
  %1291 = vmatprep.mubr.bf16.mxu0 0
  %1292 = vmatmul.mubr.bf16.gmra.mrb[0].mxu0 %v1257
  %v1293 = vpop.f32.mrb[0].mxu0
  %v1294 = vadd.f32 %v1248, %v1293
  %v1295 = vpop.f32.mrb[0].mxu0
  %v1296 = vpop.f32.mrb[0].mxu0
  %v1297 = vpop.f32.mrb[0].mxu0
  %1298 = vdwg.mxu0
  %v1299 = vadd.f32 %v1294, %v372
  %v1300 = vxor.u32 %v1299, 2147483648
  %v1301 = vmul.f32 %v1300, 1.442695
  %v1302 = vpow.pop %v1301
  %v1303 = vadd.f32 %v1302, 1.0
  %v1304 = vrcp.pop %v1303
  %v1305 = vmul.f32 1.0, %v1304
  %v1306 = vtanh.pop %v1299
  %v1307 = vmul.f32 %v1305, %v1132
  %1309 = vrot.lane.b32.xlu0 %v1306, 64
  %v1310 = vpop.permute.xlu0 %1309
  %v1312 = vmul.f32 %v1305, %v1310
  %1314 = vrot.lane.b32.xlu0 %v1312, 32
  %v1315 = vpop.permute.xlu0 %1314
  %v1317 = vadd.f32 %v1307, %v1315
  %v1318 = vtanh.pop %v1317
  %1320 = vrot.lane.b32.xlu0 %v1318, 64
  %v1321 = vpop.permute.xlu0 %1320
  %v1323 = vmul.f32 %v1305, %v1321
  %v1324 = vld [vmem:[#allocation2 + $0x30] sm:$0xff]
  %1325 = vmatprep.subr.bf16.mxu0 0
  %1326 = vmatpush1.bf16.msra.mxu0 %v184
  %1327 = vmatprep.subr.bf16.mxu0 0
  %1328 = vmatpush1.bf16.msra.mxu0 %v185
  %1329 = vmatprep.subr.bf16.mxu0 0
  %1330 = vmatpush1.bf16.msra.mxu0 0
  %1331 = vmatprep.subr.bf16.mxu0 0
  %1332 = vmatpush1.bf16.msra.mxu0 0
  %1333 = vmatprep.subr.bf16.mxu0 0
  %1334 = vmatpush1.bf16.msra.mxu0 0
  %1335 = vmatprep.subr.bf16.mxu0 0
  %1336 = vmatpush1.bf16.msra.mxu0 0
  %1337 = vmatprep.subr.bf16.mxu0 0
  %1338 = vmatpush1.bf16.msra.mxu0 0
  %1339 = vmatprep.subr.bf16.mxu0 0
  %1340 = vmatpush1.bf16.msra.mxu0 0
  %1341 = vmatprep.subr.bf16.mxu0 0
  %1342 = vmatpush1.bf16.msra.mxu0 0
  %1343 = vmatprep.subr.bf16.mxu0 0
  %1344 = vmatpush1.bf16.msra.mxu0 0
  %1345 = vmatprep.subr.bf16.mxu0 0
  %1346 = vmatpush1.bf16.msra.mxu0 0
  %1347 = vmatprep.subr.bf16.mxu0 0
  %1348 = vmatpush1.bf16.msra.mxu0 0
  %1349 = vmatprep.subr.bf16.mxu0 0
  %1350 = vmatpush1.bf16.msra.mxu0 0
  %1351 = vmatprep.subr.bf16.mxu0 0
  %1352 = vmatpush1.bf16.msra.mxu0 0
  %1353 = vmatprep.subr.bf16.mxu0 0
  %1354 = vmatpush1.bf16.msra.mxu0 0
  %1355 = vmatprep.subr.bf16.mxu0 0
  %1356 = vmatpush1.bf16.msra.mxu0 0
  %1357 = vmatprep.mubr.bf16.mxu0 0
  %1358 = vmatmul.mubr.bf16.gmra.mrb[0].mxu0 %v1257
  %v1359 = vpop.f32.mrb[0].mxu0
  %v1360 = vadd.f32 0.0, %v1359
  %v1361 = vpop.f32.mrb[0].mxu0
  %v1362 = vpop.f32.mrb[0].mxu0
  %v1363 = vpop.f32.mrb[0].mxu0
  %1364 = vdwg.mxu0
  %v1365 = vadd.f32 %v1324, %v1360
  %v1366 = vxor.u32 %v1365, 2147483648
  %v1367 = vmul.f32 %v1366, 1.442695
  %v1368 = vpow.pop %v1367
  %v1369 = vadd.f32 %v1368, 1.0
  %v1370 = vrcp.pop %v1369
  %v1371 = vmul.f32 1.0, %v1370
  %v1372 = vtanh.pop %v1365
  %v1373 = vmul.f32 %v1371, %v1198
  %1375 = vrot.lane.b32.xlu0 %v1372, 64
  %v1376 = vpop.permute.xlu0 %1375
  %v1378 = vmul.f32 %v1371, %v1376
  %1380 = vrot.lane.b32.xlu0 %v1378, 32
  %v1381 = vpop.permute.xlu0 %1380
  %v1383 = vadd.f32 %v1373, %v1381
  %v1384 = vtanh.pop %v1383
  %1386 = vrot.lane.b32.xlu0 %v1384, 64
  %v1387 = vpop.permute.xlu0 %1386
  %v1389 = vmul.f32 %v1371, %v1387
  %v1390 = vpack.c.bf16 %v1389, %v1389
  %v1391 = vpack.c.bf16 %v1323, %v1323
  %1393 = vrot.lane.b32.xlu0 %v1391, 32
  %v1394 = vpop.permute.xlu0 %1393
  %v1396 = vsel %vm188, %v1394, 0
  %1398 = vmatprep.subr.bf16.mxu0 0
  %1399 = vmatpush1.bf16.msra.mxu0 %v266
  %1400 = vmatprep.subr.bf16.mxu0 0
  %1401 = vmatpush1.bf16.msra.mxu0 %v267
  %1402 = vmatprep.subr.bf16.mxu0 0
  %1403 = vmatpush1.bf16.msra.mxu0 0
  %1404 = vmatprep.subr.bf16.mxu0 0
  %1405 = vmatpush1.bf16.msra.mxu0 0
  %1406 = vmatprep.subr.bf16.mxu0 0
  %1407 = vmatpush1.bf16.msra.mxu0 0
  %1408 = vmatprep.subr.bf16.mxu0 0
  %1409 = vmatpush1.bf16.msra.mxu0 0
  %1410 = vmatprep.subr.bf16.mxu0 0
  %1411 = vmatpush1.bf16.msra.mxu0 0
  %1412 = vmatprep.subr.bf16.mxu0 0
  %1413 = vmatpush1.bf16.msra.mxu0 0
  %1414 = vmatprep.subr.bf16.mxu0 0
  %1415 = vmatpush1.bf16.msra.mxu0 0
  %1416 = vmatprep.subr.bf16.mxu0 0
  %1417 = vmatpush1.bf16.msra.mxu0 0
  %1418 = vmatprep.subr.bf16.mxu0 0
  %1419 = vmatpush1.bf16.msra.mxu0 0
  %1420 = vmatprep.subr.bf16.mxu0 0
  %1421 = vmatpush1.bf16.msra.mxu0 0
  %1422 = vmatprep.subr.bf16.mxu0 0
  %1423 = vmatpush1.bf16.msra.mxu0 0
  %1424 = vmatprep.subr.bf16.mxu0 0
  %1425 = vmatpush1.bf16.msra.mxu0 0
  %1426 = vmatprep.subr.bf16.mxu0 0
  %1427 = vmatpush1.bf16.msra.mxu0 0
  %1428 = vmatprep.subr.bf16.mxu0 0
  %1429 = vmatpush1.bf16.msra.mxu0 0
  %1430 = vmatprep.mubr.bf16.mxu0 0
  %1431 = vmatmul.mubr.bf16.gmra.mrb[0].mxu0 %v1396
  %v1432 = vpop.f32.mrb[0].mxu0
  %v1433 = vadd.f32 0.0, %v1432
  %v1434 = vpop.f32.mrb[0].mxu0
  %v1435 = vpop.f32.mrb[0].mxu0
  %v1436 = vpop.f32.mrb[0].mxu0
  %1437 = vdwg.mxu0
  %1439 = vrot.lane.b32.xlu0 %v1390, 32
  %v1440 = vpop.permute.xlu0 %1439
  %v1442 = vsel %vm188, %v1440, 0
  %1444 = vmatprep.subr.bf16.mxu0 0
  %1445 = vmatpush1.bf16.msra.mxu0 %v321
  %1446 = vmatprep.subr.bf16.mxu0 0
  %1447 = vmatpush1.bf16.msra.mxu0 %v322
  %1448 = vmatprep.subr.bf16.mxu0 0
  %1449 = vmatpush1.bf16.msra.mxu0 0
  %1450 = vmatprep.subr.bf16.mxu0 0
  %1451 = vmatpush1.bf16.msra.mxu0 0
  %1452 = vmatprep.subr.bf16.mxu0 0
  %1453 = vmatpush1.bf16.msra.mxu0 0
  %1454 = vmatprep.subr.bf16.mxu0 0
  %1455 = vmatpush1.bf16.msra.mxu0 0
  %1456 = vmatprep.subr.bf16.mxu0 0
  %1457 = vmatpush1.bf16.msra.mxu0 0
  %1458 = vmatprep.subr.bf16.mxu0 0
  %1459 = vmatpush1.bf16.msra.mxu0 0
  %1460 = vmatprep.subr.bf16.mxu0 0
  %1461 = vmatpush1.bf16.msra.mxu0 0
  %1462 = vmatprep.subr.bf16.mxu0 0
  %1463 = vmatpush1.bf16.msra.mxu0 0
  %1464 = vmatprep.subr.bf16.mxu0 0
  %1465 = vmatpush1.bf16.msra.mxu0 0
  %1466 = vmatprep.subr.bf16.mxu0 0
  %1467 = vmatpush1.bf16.msra.mxu0 0
  %1468 = vmatprep.subr.bf16.mxu0 0
  %1469 = vmatpush1.bf16.msra.mxu0 0
  %1470 = vmatprep.subr.bf16.mxu0 0
  %1471 = vmatpush1.bf16.msra.mxu0 0
  %1472 = vmatprep.subr.bf16.mxu0 0
  %1473 = vmatpush1.bf16.msra.mxu0 0
  %1474 = vmatprep.subr.bf16.mxu0 0
  %1475 = vmatpush1.bf16.msra.mxu0 0
  %1476 = vmatprep.mubr.bf16.mxu0 0
  %1477 = vmatmul.mubr.bf16.gmra.mrb[0].mxu0 %v1442
  %v1478 = vpop.f32.mrb[0].mxu0
  %v1479 = vadd.f32 %v1433, %v1478
  %v1480 = vpop.f32.mrb[0].mxu0
  %v1481 = vpop.f32.mrb[0].mxu0
  %v1482 = vpop.f32.mrb[0].mxu0
  %1483 = vdwg.mxu0
  %v1484 = vadd.f32 %v1479, %v372
  %v1485 = vxor.u32 %v1484, 2147483648
  %v1486 = vmul.f32 %v1485, 1.442695
  %v1487 = vpow.pop %v1486
  %v1488 = vadd.f32 %v1487, 1.0
  %v1489 = vrcp.pop %v1488
  %v1490 = vmul.f32 1.0, %v1489
  %v1491 = vtanh.pop %v1484
  %v1492 = vmul.f32 %v1490, %v1317
  %1494 = vrot.lane.b32.xlu0 %v1491, 64
  %v1495 = vpop.permute.xlu0 %1494
  %v1497 = vmul.f32 %v1490, %v1495
  %1499 = vrot.lane.b32.xlu0 %v1497, 32
  %v1500 = vpop.permute.xlu0 %1499
  %v1502 = vadd.f32 %v1492, %v1500
  %v1503 = vtanh.pop %v1502
  %1505 = vrot.lane.b32.xlu0 %v1503, 64
  %v1506 = vpop.permute.xlu0 %1505
  %v1508 = vmul.f32 %v1490, %v1506
  %v1509 = vld [vmem:[#allocation2 + $0x38] sm:$0xff]
  %1510 = vmatprep.subr.bf16.mxu0 0
  %1511 = vmatpush1.bf16.msra.mxu0 %v184
  %1512 = vmatprep.subr.bf16.mxu0 0
  %1513 = vmatpush1.bf16.msra.mxu0 %v185
  %1514 = vmatprep.subr.bf16.mxu0 0
  %1515 = vmatpush1.bf16.msra.mxu0 0
  %1516 = vmatprep.subr.bf16.mxu0 0
  %1517 = vmatpush1.bf16.msra.mxu0 0
  %1518 = vmatprep.subr.bf16.mxu0 0
  %1519 = vmatpush1.bf16.msra.mxu0 0
  %1520 = vmatprep.subr.bf16.mxu0 0
  %1521 = vmatpush1.bf16.msra.mxu0 0
  %1522 = vmatprep.subr.bf16.mxu0 0
  %1523 = vmatpush1.bf16.msra.mxu0 0
  %1524 = vmatprep.subr.bf16.mxu0 0
  %1525 = vmatpush1.bf16.msra.mxu0 0
  %1526 = vmatprep.subr.bf16.mxu0 0
  %1527 = vmatpush1.bf16.msra.mxu0 0
  %1528 = vmatprep.subr.bf16.mxu0 0
  %1529 = vmatpush1.bf16.msra.mxu0 0
  %1530 = vmatprep.subr.bf16.mxu0 0
  %1531 = vmatpush1.bf16.msra.mxu0 0
  %1532 = vmatprep.subr.bf16.mxu0 0
  %1533 = vmatpush1.bf16.msra.mxu0 0
  %1534 = vmatprep.subr.bf16.mxu0 0
  %1535 = vmatpush1.bf16.msra.mxu0 0
  %1536 = vmatprep.subr.bf16.mxu0 0
  %1537 = vmatpush1.bf16.msra.mxu0 0
  %1538 = vmatprep.subr.bf16.mxu0 0
  %1539 = vmatpush1.bf16.msra.mxu0 0
  %1540 = vmatprep.subr.bf16.mxu0 0
  %1541 = vmatpush1.bf16.msra.mxu0 0
  %1542 = vmatprep.mubr.bf16.mxu0 0
  %1543 = vmatmul.mubr.bf16.gmra.mrb[0].mxu0 %v1442
  %v1544 = vpop.f32.mrb[0].mxu0
  %v1545 = vadd.f32 0.0, %v1544
  %v1546 = vpop.f32.mrb[0].mxu0
  %v1547 = vpop.f32.mrb[0].mxu0
  %v1548 = vpop.f32.mrb[0].mxu0
  %1549 = vdwg.mxu0
  %v1550 = vadd.f32 %v1509, %v1545
  %v1551 = vxor.u32 %v1550, 2147483648
  %v1552 = vmul.f32 %v1551, 1.442695
  %v1553 = vpow.pop %v1552
  %v1554 = vadd.f32 %v1553, 1.0
  %v1555 = vrcp.pop %v1554
  %v1556 = vmul.f32 1.0, %v1555
  %v1557 = vtanh.pop %v1550
  %v1558 = vmul.f32 %v1556, %v1383
  %1560 = vrot.lane.b32.xlu0 %v1557, 64
  %v1561 = vpop.permute.xlu0 %1560
  %v1563 = vmul.f32 %v1556, %v1561
  %1565 = vrot.lane.b32.xlu0 %v1563, 32
  %v1566 = vpop.permute.xlu0 %1565
  %v1568 = vadd.f32 %v1558, %v1566
  %v1569 = vtanh.pop %v1568
  %1571 = vrot.lane.b32.xlu0 %v1569, 64
  %v1572 = vpop.permute.xlu0 %1571
  %v1574 = vmul.f32 %v1556, %v1572
  %v1575 = vpack.c.bf16 %v1574, %v1574
  %v1576 = vpack.c.bf16 %v1508, %v1508
  %1578 = vrot.lane.b32.xlu0 %v1576, 32
  %v1579 = vpop.permute.xlu0 %1578
  %v1581 = vsel %vm188, %v1579, 0
  %1583 = vmatprep.subr.bf16.mxu0 0
  %1584 = vmatpush1.bf16.msra.mxu0 %v266
  %1585 = vmatprep.subr.bf16.mxu0 0
  %1586 = vmatpush1.bf16.msra.mxu0 %v267
  %1587 = vmatprep.subr.bf16.mxu0 0
  %1588 = vmatpush1.bf16.msra.mxu0 0
  %1589 = vmatprep.subr.bf16.mxu0 0
  %1590 = vmatpush1.bf16.msra.mxu0 0
  %1591 = vmatprep.subr.bf16.mxu0 0
  %1592 = vmatpush1.bf16.msra.mxu0 0
  %1593 = vmatprep.subr.bf16.mxu0 0
  %1594 = vmatpush1.bf16.msra.mxu0 0
  %1595 = vmatprep.subr.bf16.mxu0 0
  %1596 = vmatpush1.bf16.msra.mxu0 0
  %1597 = vmatprep.subr.bf16.mxu0 0
  %1598 = vmatpush1.bf16.msra.mxu0 0
  %1599 = vmatprep.subr.bf16.mxu0 0
  %1600 = vmatpush1.bf16.msra.mxu0 0
  %1601 = vmatprep.subr.bf16.mxu0 0
  %1602 = vmatpush1.bf16.msra.mxu0 0
  %1603 = vmatprep.subr.bf16.mxu0 0
  %1604 = vmatpush1.bf16.msra.mxu0 0
  %1605 = vmatprep.subr.bf16.mxu0 0
  %1606 = vmatpush1.bf16.msra.mxu0 0
  %1607 = vmatprep.subr.bf16.mxu0 0
  %1608 = vmatpush1.bf16.msra.mxu0 0
  %1609 = vmatprep.subr.bf16.mxu0 0
  %1610 = vmatpush1.bf16.msra.mxu0 0
  %1611 = vmatprep.subr.bf16.mxu0 0
  %1612 = vmatpush1.bf16.msra.mxu0 0
  %1613 = vmatprep.subr.bf16.mxu0 0
  %1614 = vmatpush1.bf16.msra.mxu0 0
  %1615 = vmatprep.mubr.bf16.mxu0 0
  %1616 = vmatmul.mubr.bf16.gmra.mrb[0].mxu0 %v1581
  %v1617 = vpop.f32.mrb[0].mxu0
  %v1618 = vadd.f32 0.0, %v1617
  %v1619 = vpop.f32.mrb[0].mxu0
  %v1620 = vpop.f32.mrb[0].mxu0
  %v1621 = vpop.f32.mrb[0].mxu0
  %1622 = vdwg.mxu0
  %1624 = vrot.lane.b32.xlu0 %v1575, 32
  %v1625 = vpop.permute.xlu0 %1624
  %v1627 = vsel %vm188, %v1625, 0
  %1629 = vmatprep.subr.bf16.mxu0 0
  %1630 = vmatpush1.bf16.msra.mxu0 %v321
  %1631 = vmatprep.subr.bf16.mxu0 0
  %1632 = vmatpush1.bf16.msra.mxu0 %v322
  %1633 = vmatprep.subr.bf16.mxu0 0
  %1634 = vmatpush1.bf16.msra.mxu0 0
  %1635 = vmatprep.subr.bf16.mxu0 0
  %1636 = vmatpush1.bf16.msra.mxu0 0
  %1637 = vmatprep.subr.bf16.mxu0 0
  %1638 = vmatpush1.bf16.msra.mxu0 0
  %1639 = vmatprep.subr.bf16.mxu0 0
  %1640 = vmatpush1.bf16.msra.mxu0 0
  %1641 = vmatprep.subr.bf16.mxu0 0
  %1642 = vmatpush1.bf16.msra.mxu0 0
  %1643 = vmatprep.subr.bf16.mxu0 0
  %1644 = vmatpush1.bf16.msra.mxu0 0
  %1645 = vmatprep.subr.bf16.mxu0 0
  %1646 = vmatpush1.bf16.msra.mxu0 0
  %1647 = vmatprep.subr.bf16.mxu0 0
  %1648 = vmatpush1.bf16.msra.mxu0 0
  %1649 = vmatprep.subr.bf16.mxu0 0
  %1650 = vmatpush1.bf16.msra.mxu0 0
  %1651 = vmatprep.subr.bf16.mxu0 0
  %1652 = vmatpush1.bf16.msra.mxu0 0
  %1653 = vmatprep.subr.bf16.mxu0 0
  %1654 = vmatpush1.bf16.msra.mxu0 0
  %1655 = vmatprep.subr.bf16.mxu0 0
  %1656 = vmatpush1.bf16.msra.mxu0 0
  %1657 = vmatprep.subr.bf16.mxu0 0
  %1658 = vmatpush1.bf16.msra.mxu0 0
  %1659 = vmatprep.subr.bf16.mxu0 0
  %1660 = vmatpush1.bf16.msra.mxu0 0
  %1661 = vmatprep.mubr.bf16.mxu0 0
  %1662 = vmatmul.mubr.bf16.gmra.mrb[0].mxu0 %v1627
  %v1663 = vpop.f32.mrb[0].mxu0
  %v1664 = vadd.f32 %v1618, %v1663
  %v1665 = vpop.f32.mrb[0].mxu0
  %v1666 = vpop.f32.mrb[0].mxu0
  %v1667 = vpop.f32.mrb[0].mxu0
  %1668 = vdwg.mxu0
  %v1669 = vadd.f32 %v1664, %v372
  %v1670 = vxor.u32 %v1669, 2147483648
  %v1671 = vmul.f32 %v1670, 1.442695
  %v1672 = vpow.pop %v1671
  %v1673 = vadd.f32 %v1672, 1.0
  %v1674 = vrcp.pop %v1673
  %v1675 = vmul.f32 1.0, %v1674
  %v1676 = vtanh.pop %v1669
  %v1677 = vmul.f32 %v1675, %v1502
  %1679 = vrot.lane.b32.xlu0 %v1676, 64
  %v1680 = vpop.permute.xlu0 %1679
  %v1682 = vmul.f32 %v1675, %v1680
  %1684 = vrot.lane.b32.xlu0 %v1682, 32
  %v1685 = vpop.permute.xlu0 %1684
  %v1687 = vadd.f32 %v1677, %v1685
  %v1688 = vtanh.pop %v1687
  %1690 = vrot.lane.b32.xlu0 %v1688, 64
  %v1691 = vpop.permute.xlu0 %1690
  %v1693 = vmul.f32 %v1675, %v1691
  %v1694 = vpack.c.bf16 %v1693, %v1693
  %v1695 = vld [vmem:[%s7] sm:$0xf]
  %v1696 = vld [vmem:[%s7 + $0x4] sm:$0xf]
  %v1697 = vld [vmem:[%s7 + $0x8] sm:$0xf]
  %v1698 = vld [vmem:[%s7 + $0xc] sm:$0xf]
  %v1699 = vld [vmem:[%s8] sm:$0x1]
  %v1701 = vlaneseq
  %v1702 = vshrl.u32 %v1701, 7
  %v1703 = vsub.s32 0, %v1702
  %v1704 = vrot.slane %v1699, %v1703
  %1707 = vrot.lane.b32.xlu0 %v1694, 32
  %v1708 = vpop.permute.xlu0 %1707
  %v1713 = vunpack.c.l.b16 %v1695
  %v1714 = vunpack.c.l.b16 %v1696
  %v1715 = vunpack.c.l.b16 %v1697
  %v1716 = vunpack.c.l.b16 %v1698
  %v1717 = vpack.c.b16 %v1714, %v1713
  %v1718 = vpack.c.b16 %v1716, %v1715
  %v1722 = vsel %vm188, %v1708, 0
  %1724 = vmatprep.subr.bf16.mxu0 0
  %1725 = vmatpush1.bf16.msra.mxu0 %v1717
  %1726 = vmatprep.subr.bf16.mxu0 0
  %1727 = vmatpush1.bf16.msra.mxu0 %v1718
  %1728 = vmatprep.subr.bf16.mxu0 0
  %1729 = vmatpush1.bf16.msra.mxu0 0
  %1730 = vmatprep.subr.bf16.mxu0 0
  %1731 = vmatpush1.bf16.msra.mxu0 0
  %1732 = vmatprep.subr.bf16.mxu0 0
  %1733 = vmatpush1.bf16.msra.mxu0 0
  %1734 = vmatprep.subr.bf16.mxu0 0
  %1735 = vmatpush1.bf16.msra.mxu0 0
  %1736 = vmatprep.subr.bf16.mxu0 0
  %1737 = vmatpush1.bf16.msra.mxu0 0
  %1738 = vmatprep.subr.bf16.mxu0 0
  %1739 = vmatpush1.bf16.msra.mxu0 0
  %1740 = vmatprep.subr.bf16.mxu0 0
  %1741 = vmatpush1.bf16.msra.mxu0 0
  %1742 = vmatprep.subr.bf16.mxu0 0
  %1743 = vmatpush1.bf16.msra.mxu0 0
  %1744 = vmatprep.subr.bf16.mxu0 0
  %1745 = vmatpush1.bf16.msra.mxu0 0
  %1746 = vmatprep.subr.bf16.mxu0 0
  %1747 = vmatpush1.bf16.msra.mxu0 0
  %1748 = vmatprep.subr.bf16.mxu0 0
  %1749 = vmatpush1.bf16.msra.mxu0 0
  %1750 = vmatprep.subr.bf16.mxu0 0
  %1751 = vmatpush1.bf16.msra.mxu0 0
  %1752 = vmatprep.subr.bf16.mxu0 0
  %1753 = vmatpush1.bf16.msra.mxu0 0
  %1754 = vmatprep.subr.bf16.mxu0 0
  %1755 = vmatpush1.bf16.msra.mxu0 0
  %1756 = vmatprep.mubr.bf16.mxu0 0
  %1757 = vmatmul.mubr.bf16.gmra.mrb[0].mxu0 %v1722
  %v1758 = vpop.f32.mrb[0].mxu0
  %v1759 = vadd.f32 %v1704, %v1758
  %v1760 = vpop.f32.mrb[0].mxu0
  %v1761 = vpop.f32.mrb[0].mxu0
  %v1762 = vpop.f32.mrb[0].mxu0
  %1763 = vdwg.mxu0
  %1764 = vst [vmem:[%s9] sm:$0xff] %v1759
  // Predicated region
  $region38: #{_forward_impl.1} parent=0 // pred_check
    _
  $region39: #{_forward_impl.1} parent=0 // pred_check_branch
    %1766 = sbr.rel (0) target = $region41
  $region40: #{_forward_impl.1} parent=0 // pred_region
    _
  $region41: #{_forward_impl.1} parent=0 // pred_fallthru
    _
  // Predicated region
  $region42: #{_forward_impl.1} parent=0 // pred_check
    _
  $region43: #{_forward_impl.1} parent=0 // pred_check_branch
    %1768 = sbr.rel (0) target = $region45
  $region44: #{_forward_impl.1} parent=0 // pred_region
    _
  $region45: #{_forward_impl.1} parent=0 // pred_fallthru
    _

</llo_original>
